<compile_context>
chip_gen: v6e
topology: v6e:2x2x1
jax: 0.10.0
libtpu: 0.0.40
codegen_flags: <defaults>
</compile_context>

<pallas_src>
import jax
import jax.numpy as jnp
from jax import lax
from jax.experimental import pallas as pl
from jax.experimental.pallas import tpu as pltpu

BN_EPS = 1e-5


# --------------------------------------------------------------------------
# Generation-aware VMEM budget and row-tile selection
# --------------------------------------------------------------------------
def _vmem_limit_bytes():
    """Scoped-VMEM limit ~= 3/4 of physical capacity (96 MiB on v5e/v6e, 48 MiB on v7x)."""
    cap = None
    try:
        info = pltpu.get_tpu_info()
        cap = getattr(info, "vmem_capacity_bytes", None)
    except Exception:
        cap = None
    if not cap:
        cap = 64 * 1024 * 1024  # conservative fallback (v7x physical VMEM)
    return int(min(cap * 3 // 4, 100 * 1024 * 1024))


def _pick_row_tile(B, H, W, C, Cp, vmem_budget):
    """Largest image-row tile TH (divisor of H) whose per-step residency fits
    the budget, preferring >= 8 grid steps for pipelining / v7x megacore."""

    def est(th):
        rows = th * W
        return (2 * (th + 2) * (W + 2) * C * 4      # double-buffered input tile
                + 2 * rows * Cp * 4                  # double-buffered output tile
                + 9 * C * 3 * Cp * 2                 # resident bf16 weights
                + 2 * 3 * Cp * 4                     # resident scale/shift
                + rows * 9 * C * 2                   # bf16 tap-slab scratch
                + 4 * rows * 3 * Cp * 4)             # proj/norm/softmax temporaries

    divisors = [d for d in range(1, H + 1) if H % d == 0]
    fits = [d for d in divisors if est(d) <= vmem_budget] or [1]
    target_steps = min(8, B * H)
    good = [d for d in fits if B * (H // d) >= target_steps]
    return max(good) if good else max(fits)


# --------------------------------------------------------------------------
# Kernels
# --------------------------------------------------------------------------
def _build_tap_slab(xch_ref, slab_ref):
    """Write the 3x3 im2col tap slab (rows, 9*C) into bf16 VMEM scratch."""
    _, thp2, wp2, c = xch_ref.shape
    th, w = thp2 - 2, wp2 - 2
    rows = th * w
    # TODO(synk): for very large tiles, replace the 9 strided reshapes with
    # pltpu.roll-based lane shifts (fold (W, C) into the lane axis) so the tap
    # construction stays off the vector load/store slots.
    for t in range(9):
        dy, dx = divmod(t, 3)
        tap = xch_ref[0, dy:dy + th, dx:dx + w, :].reshape(rows, c)
        slab_ref[:, t * c:(t + 1) * c] = tap.astype(jnp.bfloat16)


def _stats_kernel(xch_ref, w_ref, sum_ref, sumsq_ref, slab_ref):
    """Pass 1: per-channel sum / sum-of-squares of the conv projections."""
    _build_tap_slab(xch_ref, slab_ref)
    proj = jnp.dot(slab_ref[...], w_ref[...],
                   preferred_element_type=jnp.float32)      # (rows, 3*Cp) f32

    @pl.when(pl.program_id(1) == 0)
    def _():
        sum_ref[...] = jnp.zeros_like(sum_ref)
        sumsq_ref[...] = jnp.zeros_like(sumsq_ref)

    sum_ref[0] += jnp.sum(proj, axis=0, keepdims=True)
    sumsq_ref[0] += jnp.sum(proj * proj, axis=0, keepdims=True)


def _apply_kernel(xch_ref, w_ref, scale_ref, shift_ref, o_ref, slab_ref):
    """Pass 2: folded BN + channel softmax(k*q) * v + residual (lane-dense out)."""
    _, thp2, wp2, c = xch_ref.shape
    th, w = thp2 - 2, wp2 - 2
    rows = th * w
    cp = scale_ref.shape[-1] // 3

    _build_tap_slab(xch_ref, slab_ref)
    proj = jnp.dot(slab_ref[...], w_ref[...],
                   preferred_element_type=jnp.float32)      # (rows, 3*Cp) f32
    norm = proj * scale_ref[...] + shift_ref[...]            # folded BatchNorm

    k = norm[:, 0:cp]                                        # lane-aligned views
    q = norm[:, cp:2 * cp]
    v = norm[:, 2 * cp:3 * cp]

    s = k * q
    if c < cp:                                               # mask padded lanes
        col = lax.broadcasted_iota(jnp.int32, s.shape, 1)
        s = jnp.where(col < c, s, jnp.float32(-1e30))
    s = s - jnp.max(s, axis=-1, keepdims=True)
    e = jnp.exp(s)
    denom = jnp.sum(e, axis=-1, keepdims=True)
    r = pl.reciprocal(denom, approx=True)                    # EUP vrcp seed
    r = r * (2.0 - denom * r)                                # one Newton step
    av = (e * r) * v                                         # padded lanes == 0

    # Residual = exact f32 center tap of the padded input (not the bf16 slab).
    resid = xch_ref[0, 1:1 + th, 1:1 + w, :].reshape(rows, c)
    if c == cp:
        o_ref[0] = resid + av
    else:
        o_ref[0] = av                        # lane-dense (rows, Cp) store
        o_ref[0, :, :c] += resid             # small masked residual add


# --------------------------------------------------------------------------
# Wrapper
# --------------------------------------------------------------------------
def softblock_pallas(x_nchw, w_hwio, bias, gamma, beta):
    """x_nchw: (B, C, H, W). w_hwio: (3, 3, C, 3C) packed [K|Q|V].
    bias/gamma/beta: (3C,) packed [K|Q|V].  Training-mode BatchNorm."""
    B, C, H, W = x_nchw.shape
    Cp = ((C + 127) // 128) * 128            # lane-pad each projection's Cout
    N = B * H * W
    K = 9 * C                                # fused-matmul contraction dim

    vmem_limit = _vmem_limit_bytes()
    TH = _pick_row_tile(B, H, W, C, Cp, vmem_limit // 2)
    T = H // TH
    BT = B * T
    rows = TH * W

    # NHWC + spatial 'SAME' padding, then pre-chunk into row tiles with a
    # 1-row halo on each side (fixed-size tiles for BlockSpec pipelining).
    # TODO(synk): for very large H*W, replace pre-chunking with pl.ANY + manual
    # halo DMA to avoid duplicating the 2 halo rows per tile in HBM.
    x = jnp.transpose(x_nchw, (0, 2, 3, 1)).astype(jnp.float32)
    xpad = jnp.pad(x, ((0, 0), (1, 1), (1, 1), (0, 0)))       # (B, H+2, W+2, C)
    xch = jnp.stack([xpad[:, t * TH:t * TH + TH + 2] for t in range(T)], axis=1)
    xch = xch.reshape(BT, TH + 2, W + 2, C)

    # Pack weights for the fused matmul: (3,3,Cin,3C) -> (9*Cin, 3*Cp) bf16,
    # each projection's Cout lane-padded to Cp with zeros.
    # TODO(synk): for production C far below 128, repack several spatial
    # positions' channels into one 128-lane row instead of padding to Cp.
    wpk = w_hwio.astype(jnp.float32).reshape(3, 3, C, 3, C)
    wpk = jnp.pad(wpk, ((0, 0), (0, 0), (0, 0), (0, 0), (0, Cp - C)))
    wpk = wpk.reshape(K, 3 * Cp).astype(jnp.bfloat16)

    def _pad_vec(p):  # (3C,) -> (1, 3*Cp), zero-filled padding
        return jnp.pad(p.astype(jnp.float32).reshape(3, C),
                       ((0, 0), (0, Cp - C))).reshape(1, 3 * Cp)

    gamma_p = _pad_vec(gamma)
    beta_p = _pad_vec(beta)
    del bias  # conv bias cancels exactly under training-mode BatchNorm

    conv_flops = 2 * N * K * (3 * Cp)

    # ---- Pass 1: BN batch statistics (per-channel sum / sum-of-squares) ----
    P = 2 if BT % 2 == 0 else 1          # 2-way parallel split for v7x megacore
    TPB = BT // P
    psum, psumsq = pl.pallas_call(
        _stats_kernel,
        grid=(P, TPB),
        in_specs=[
            pl.BlockSpec((1, TH + 2, W + 2, C),
                         lambda p, t: (p * TPB + t, 0, 0, 0)),
            pl.BlockSpec((K, 3 * Cp), lambda p, t: (0, 0)),       # resident
        ],
        out_specs=(pl.BlockSpec((1, 1, 3 * Cp), lambda p, t: (p, 0, 0)),
                   pl.BlockSpec((1, 1, 3 * Cp), lambda p, t: (p, 0, 0))),
        out_shape=(jax.ShapeDtypeStruct((P, 1, 3 * Cp), jnp.float32),
                   jax.ShapeDtypeStruct((P, 1, 3 * Cp), jnp.float32)),
        scratch_shapes=[pltpu.VMEM((rows, K), jnp.bfloat16)],
        compiler_params=pltpu.CompilerParams(
            dimension_semantics=("parallel", "arbitrary"),
            vmem_limit_bytes=vmem_limit),
        cost_estimate=pl.CostEstimate(
            flops=conv_flops, transcendentals=0,
            bytes_accessed=xch.size * 4 + wpk.size * 2 + 2 * P * 3 * Cp * 4),
    )(xch, wpk)

    # Combine per-core partials and fold BN into a single scale/shift (tiny op).
    # TODO(synk): for production-size N, switch to a centered / two-pass
    # variance to avoid E[x^2]-E[x]^2 cancellation.
    sums = jnp.sum(psum, axis=0)                 # (1, 3*Cp)
    sumsq = jnp.sum(psumsq, axis=0)
    mean = sums / N
    var = jnp.maximum(sumsq / N - mean * mean, 0.0)
    scale = gamma_p * lax.rsqrt(var + BN_EPS)
    shift = beta_p - mean * scale

    # ---- Pass 2: folded BN + softmax attention + residual ------------------
    out_pad = pl.pallas_call(
        _apply_kernel,
        grid=(BT,),
        in_specs=[
            pl.BlockSpec((1, TH + 2, W + 2, C), lambda b: (b, 0, 0, 0)),
            pl.BlockSpec((K, 3 * Cp), lambda b: (0, 0)),          # resident
            pl.BlockSpec((1, 3 * Cp), lambda b: (0, 0)),          # resident
            pl.BlockSpec((1, 3 * Cp), lambda b: (0, 0)),          # resident
        ],
        out_specs=pl.BlockSpec((1, rows, Cp), lambda b: (b, 0, 0)),
        out_shape=jax.ShapeDtypeStruct((BT, rows, Cp), jnp.float32),
        scratch_shapes=[pltpu.VMEM((rows, K), jnp.bfloat16)],
        compiler_params=pltpu.CompilerParams(
            dimension_semantics=("parallel",),   # shards across v7x's 2 TCs
            vmem_limit_bytes=vmem_limit),
        cost_estimate=pl.CostEstimate(
            flops=conv_flops + 12 * N * 3 * Cp,
            transcendentals=N * Cp + N,
            bytes_accessed=(xch.size * 4 + wpk.size * 2 + 2 * 3 * Cp * 4
                            + BT * rows * Cp * 4)),
    )(xch, wpk, scale, shift)

    out = out_pad.reshape(B, H, W, Cp)[..., :C]   # drop lane padding
    return jnp.transpose(out, (0, 3, 1, 2))       # back to NCHW


# --------------------------------------------------------------------------
# References
# --------------------------------------------------------------------------
def softblock_reference(x_nchw, w_hwio, bias, gamma, beta, *, bf16_matmul=False):
    """Pure-JAX reference of the PyTorch module (training-mode BatchNorm).

    With bf16_matmul=True the conv operands are rounded to bf16 (accumulation
    stays f32), matching the kernel's MXU precision; the residual and all
    post-conv math stay f32 in both cases."""
    B, C, H, W = x_nchw.shape
    x = jnp.transpose(x_nchw, (0, 2, 3, 1)).astype(jnp.float32)
    xc = x.astype(jnp.bfloat16).astype(jnp.float32) if bf16_matmul else x
    wc = w_hwio.astype(jnp.float32)
    if bf16_matmul:
        wc = wc.astype(jnp.bfloat16).astype(jnp.float32)

    def conv(w, b):
        y = lax.conv_general_dilated(
            xc, w, window_strides=(1, 1), padding="SAME",
            dimension_numbers=("NHWC", "HWIO", "NHWC"),
            precision=lax.Precision.HIGHEST)
        return y + b

    def bn(y, g, be):
        mean = jnp.mean(y, axis=(0, 1, 2), keepdims=True)
        var = jnp.mean((y - mean) ** 2, axis=(0, 1, 2), keepdims=True)
        return (y - mean) * lax.rsqrt(var + BN_EPS) * g + be

    outs = []
    for i in range(3):
        wi = wc[..., i * C:(i + 1) * C]
        outs.append(bn(conv(wi, bias[i * C:(i + 1) * C]),
                       gamma[i * C:(i + 1) * C], beta[i * C:(i + 1) * C]))
    k, q, v = outs
    attn = jax.nn.softmax(k * q, axis=-1)        # Softmax2d == channel softmax
    out = x + attn * v
    return jnp.transpose(out, (0, 3, 1, 2))


if __name__ == "__main__":
    B, C, H, W = 2, 4, 16, 16
    key = jax.random.PRNGKey(0)
    kx, kw, kb, kg, kbe = jax.random.split(key, 5)

    x = jax.random.normal(kx, (B, C, H, W), dtype=jnp.float32)
    # Combined conv weights for [key | query | value], HWIO layout (3,3,Cin,3*Cout).
    w_hwio = jax.random.normal(kw, (3, 3, C, 3 * C), dtype=jnp.float32) * 0.1
    bias = jax.random.normal(kb, (3 * C,), dtype=jnp.float32) * 0.05
    gamma = 1.0 + 0.1 * jax.random.normal(kg, (3 * C,), dtype=jnp.float32)
    beta = 0.1 * jax.random.normal(kbe, (3 * C,), dtype=jnp.float32)

    out = jax.block_until_ready(softblock_pallas(x, w_hwio, bias, gamma, beta))
    assert out.shape == x.shape

    # Tight check vs. a matched-precision reference (bf16 conv operands,
    # f32 everything else) — validates the kernel pipeline itself.
    ref_match = softblock_reference(x, w_hwio, bias, gamma, beta, bf16_matmul=True)
    err_match = float(jnp.max(jnp.abs(out - ref_match)))
    assert jnp.allclose(out, ref_match, atol=5e-4, rtol=5e-4), err_match

    # Sanity check vs. the pure-f32 module semantics; the only deviation is
    # the standard bf16 rounding of the MXU matmul operands.
    ref_f32 = softblock_reference(x, w_hwio, bias, gamma, beta, bf16_matmul=False)
    err_f32 = float(jnp.max(jnp.abs(out - ref_f32)))
    assert err_f32 < 0.25, err_f32

    print("KERNEL_OK")
</pallas_src>

<mosaic_0001>
module attributes {stable_mosaic.version = 11 : i64} {
  func.func @_stats_kernel(%arg0: i32, %arg1: i32, %arg2: memref<1x6x18x4xf32, #tpu.memory_space<vmem>>, %arg3: memref<36x384xbf16, #tpu.memory_space<vmem>>, %arg4: memref<1x1x384xf32, #tpu.memory_space<vmem>>, %arg5: memref<1x1x384xf32, #tpu.memory_space<vmem>>, %arg6: memref<64x36xbf16, #tpu.memory_space<vmem>>) attributes {dimension_semantics = [#tpu.dimension_semantics<parallel>, #tpu.dimension_semantics<arbitrary>], iteration_bounds = array<i64: 2, 4>, scalar_prefetch = 0 : i64, scratch_operands = 1 : i64, tpu.core_type = #tpu.core_type<tc>, window_params = [{transform_indices = @transform_0, window_bounds = array<i64: 1, 6, 18, 4>}, {pipeline_mode = #tpu.pipeline_mode<synchronous>, transform_indices = @transform_1, window_bounds = array<i64: 36, 384>}, {transform_indices = @transform_2, window_bounds = array<i64: 1, 1, 384>}, {transform_indices = @transform_3, window_bounds = array<i64: 1, 1, 384>}]} {
    %c0 = arith.constant 0 : index
    %c0_0 = arith.constant 0 : index
    %c0_1 = arith.constant 0 : index
    %c0_2 = arith.constant 0 : index
    %0 = vector.load %arg2[%c0, %c0_0, %c0_1, %c0_2] : memref<1x6x18x4xf32, #tpu.memory_space<vmem>>, vector<1x4x16x4xf32>
    %1 = vector.shape_cast %0 : vector<1x4x16x4xf32> to vector<4x16x4xf32>
    %2 = vector.shape_cast %1 : vector<4x16x4xf32> to vector<64x4xf32>
    %3 = arith.truncf %2 : vector<64x4xf32> to vector<64x4xbf16>
    %c0_3 = arith.constant 0 : index
    %c0_4 = arith.constant 0 : index
    %4 = vector.load %arg6[%c0_3, %c0_4] : memref<64x36xbf16, #tpu.memory_space<vmem>>, vector<64x4xbf16>
    tpu.vector_store %arg6[%c0_3, %c0_4], %3 {strides = array<i32>} : memref<64x36xbf16, #tpu.memory_space<vmem>>, vector<64x4xbf16>,
    %c0_5 = arith.constant 0 : index
    %c0_6 = arith.constant 0 : index
    %c1 = arith.constant 1 : index
    %c0_7 = arith.constant 0 : index
    %5 = vector.load %arg2[%c0_5, %c0_6, %c1, %c0_7] : memref<1x6x18x4xf32, #tpu.memory_space<vmem>>, vector<1x4x16x4xf32>
    %6 = vector.shape_cast %5 : vector<1x4x16x4xf32> to vector<4x16x4xf32>
    %7 = vector.shape_cast %6 : vector<4x16x4xf32> to vector<64x4xf32>
    %8 = arith.truncf %7 : vector<64x4xf32> to vector<64x4xbf16>
    %c0_8 = arith.constant 0 : index
    %c4 = arith.constant 4 : index
    %9 = vector.load %arg6[%c0_8, %c4] : memref<64x36xbf16, #tpu.memory_space<vmem>>, vector<64x4xbf16>
    tpu.vector_store %arg6[%c0_8, %c4], %8 {strides = array<i32>} : memref<64x36xbf16, #tpu.memory_space<vmem>>, vector<64x4xbf16>,
    %c0_9 = arith.constant 0 : index
    %c0_10 = arith.constant 0 : index
    %c2 = arith.constant 2 : index
    %c0_11 = arith.constant 0 : index
    %10 = vector.load %arg2[%c0_9, %c0_10, %c2, %c0_11] : memref<1x6x18x4xf32, #tpu.memory_space<vmem>>, vector<1x4x16x4xf32>
    %11 = vector.shape_cast %10 : vector<1x4x16x4xf32> to vector<4x16x4xf32>
    %12 = vector.shape_cast %11 : vector<4x16x4xf32> to vector<64x4xf32>
    %13 = arith.truncf %12 : vector<64x4xf32> to vector<64x4xbf16>
    %c0_12 = arith.constant 0 : index
    %c8 = arith.constant 8 : index
    %14 = vector.load %arg6[%c0_12, %c8] : memref<64x36xbf16, #tpu.memory_space<vmem>>, vector<64x4xbf16>
    tpu.vector_store %arg6[%c0_12, %c8], %13 {strides = array<i32>} : memref<64x36xbf16, #tpu.memory_space<vmem>>, vector<64x4xbf16>,
    %c0_13 = arith.constant 0 : index
    %c1_14 = arith.constant 1 : index
    %c0_15 = arith.constant 0 : index
    %c0_16 = arith.constant 0 : index
    %15 = vector.load %arg2[%c0_13, %c1_14, %c0_15, %c0_16] : memref<1x6x18x4xf32, #tpu.memory_space<vmem>>, vector<1x4x16x4xf32>
    %16 = vector.shape_cast %15 : vector<1x4x16x4xf32> to vector<4x16x4xf32>
    %17 = vector.shape_cast %16 : vector<4x16x4xf32> to vector<64x4xf32>
    %18 = arith.truncf %17 : vector<64x4xf32> to vector<64x4xbf16>
    %c0_17 = arith.constant 0 : index
    %c12 = arith.constant 12 : index
    %19 = vector.load %arg6[%c0_17, %c12] : memref<64x36xbf16, #tpu.memory_space<vmem>>, vector<64x4xbf16>
    tpu.vector_store %arg6[%c0_17, %c12], %18 {strides = array<i32>} : memref<64x36xbf16, #tpu.memory_space<vmem>>, vector<64x4xbf16>,
    %c0_18 = arith.constant 0 : index
    %c1_19 = arith.constant 1 : index
    %c1_20 = arith.constant 1 : index
    %c0_21 = arith.constant 0 : index
    %20 = vector.load %arg2[%c0_18, %c1_19, %c1_20, %c0_21] : memref<1x6x18x4xf32, #tpu.memory_space<vmem>>, vector<1x4x16x4xf32>
    %21 = vector.shape_cast %20 : vector<1x4x16x4xf32> to vector<4x16x4xf32>
    %22 = vector.shape_cast %21 : vector<4x16x4xf32> to vector<64x4xf32>
    %23 = arith.truncf %22 : vector<64x4xf32> to vector<64x4xbf16>
    %c0_22 = arith.constant 0 : index
    %c16 = arith.constant 16 : index
    %24 = vector.load %arg6[%c0_22, %c16] : memref<64x36xbf16, #tpu.memory_space<vmem>>, vector<64x4xbf16>
    tpu.vector_store %arg6[%c0_22, %c16], %23 {strides = array<i32>} : memref<64x36xbf16, #tpu.memory_space<vmem>>, vector<64x4xbf16>,
    %c0_23 = arith.constant 0 : index
    %c1_24 = arith.constant 1 : index
    %c2_25 = arith.constant 2 : index
    %c0_26 = arith.constant 0 : index
    %25 = vector.load %arg2[%c0_23, %c1_24, %c2_25, %c0_26] : memref<1x6x18x4xf32, #tpu.memory_space<vmem>>, vector<1x4x16x4xf32>
    %26 = vector.shape_cast %25 : vector<1x4x16x4xf32> to vector<4x16x4xf32>
    %27 = vector.shape_cast %26 : vector<4x16x4xf32> to vector<64x4xf32>
    %28 = arith.truncf %27 : vector<64x4xf32> to vector<64x4xbf16>
    %c0_27 = arith.constant 0 : index
    %c20 = arith.constant 20 : index
    %29 = vector.load %arg6[%c0_27, %c20] : memref<64x36xbf16, #tpu.memory_space<vmem>>, vector<64x4xbf16>
    tpu.vector_store %arg6[%c0_27, %c20], %28 {strides = array<i32>} : memref<64x36xbf16, #tpu.memory_space<vmem>>, vector<64x4xbf16>,
    %c0_28 = arith.constant 0 : index
    %c2_29 = arith.constant 2 : index
    %c0_30 = arith.constant 0 : index
    %c0_31 = arith.constant 0 : index
    %30 = vector.load %arg2[%c0_28, %c2_29, %c0_30, %c0_31] : memref<1x6x18x4xf32, #tpu.memory_space<vmem>>, vector<1x4x16x4xf32>
    %31 = vector.shape_cast %30 : vector<1x4x16x4xf32> to vector<4x16x4xf32>
    %32 = vector.shape_cast %31 : vector<4x16x4xf32> to vector<64x4xf32>
    %33 = arith.truncf %32 : vector<64x4xf32> to vector<64x4xbf16>
    %c0_32 = arith.constant 0 : index
    %c24 = arith.constant 24 : index
    %34 = vector.load %arg6[%c0_32, %c24] : memref<64x36xbf16, #tpu.memory_space<vmem>>, vector<64x4xbf16>
    tpu.vector_store %arg6[%c0_32, %c24], %33 {strides = array<i32>} : memref<64x36xbf16, #tpu.memory_space<vmem>>, vector<64x4xbf16>,
    %c0_33 = arith.constant 0 : index
    %c2_34 = arith.constant 2 : index
    %c1_35 = arith.constant 1 : index
    %c0_36 = arith.constant 0 : index
    %35 = vector.load %arg2[%c0_33, %c2_34, %c1_35, %c0_36] : memref<1x6x18x4xf32, #tpu.memory_space<vmem>>, vector<1x4x16x4xf32>
    %36 = vector.shape_cast %35 : vector<1x4x16x4xf32> to vector<4x16x4xf32>
    %37 = vector.shape_cast %36 : vector<4x16x4xf32> to vector<64x4xf32>
    %38 = arith.truncf %37 : vector<64x4xf32> to vector<64x4xbf16>
    %c0_37 = arith.constant 0 : index
    %c28 = arith.constant 28 : index
    %39 = vector.load %arg6[%c0_37, %c28] : memref<64x36xbf16, #tpu.memory_space<vmem>>, vector<64x4xbf16>
    tpu.vector_store %arg6[%c0_37, %c28], %38 {strides = array<i32>} : memref<64x36xbf16, #tpu.memory_space<vmem>>, vector<64x4xbf16>,
    %c0_38 = arith.constant 0 : index
    %c2_39 = arith.constant 2 : index
    %c2_40 = arith.constant 2 : index
    %c0_41 = arith.constant 0 : index
    %40 = vector.load %arg2[%c0_38, %c2_39, %c2_40, %c0_41] : memref<1x6x18x4xf32, #tpu.memory_space<vmem>>, vector<1x4x16x4xf32>
    %41 = vector.shape_cast %40 : vector<1x4x16x4xf32> to vector<4x16x4xf32>
    %42 = vector.shape_cast %41 : vector<4x16x4xf32> to vector<64x4xf32>
    %43 = arith.truncf %42 : vector<64x4xf32> to vector<64x4xbf16>
    %c0_42 = arith.constant 0 : index
    %c32 = arith.constant 32 : index
    %44 = vector.load %arg6[%c0_42, %c32] : memref<64x36xbf16, #tpu.memory_space<vmem>>, vector<64x4xbf16>
    tpu.vector_store %arg6[%c0_42, %c32], %43 {strides = array<i32>} : memref<64x36xbf16, #tpu.memory_space<vmem>>, vector<64x4xbf16>,
    %c0_43 = arith.constant 0 : index
    %c0_44 = arith.constant 0 : index
    %45 = vector.load %arg6[%c0_43, %c0_44] : memref<64x36xbf16, #tpu.memory_space<vmem>>, vector<64x36xbf16>
    %c0_45 = arith.constant 0 : index
    %c0_46 = arith.constant 0 : index
    %46 = vector.load %arg3[%c0_45, %c0_46] : memref<36x384xbf16, #tpu.memory_space<vmem>>, vector<36x384xbf16>
    %cst = arith.constant dense<0.000000e+00> : vector<64x384xf32>
    %47 = tpu.matmul %45, %46, %cst {dimension_numbers = #tpu.dot_dimension_numbers<[1], [0], [0], [1], [0, 0, 1, 1], [], []>} : vector<64x36xbf16>, vector<36x384xbf16>, vector<64x384xf32> -> vector<64x384xf32>
    %c0_i32 = arith.constant 0 : i32
    %48 = arith.cmpi eq, %arg1, %c0_i32 : i32
    %49 = arith.extui %48 : i1 to i32
    %c0_i32_47 = arith.constant 0 : i32
    %50 = arith.cmpi ne, %49, %c0_i32_47 : i32
    scf.if %50 {
      %cst_62 = arith.constant 0.000000e+00 : f32
      %68 = vector.broadcast %cst_62 : f32 to vector<1x1x384xf32>
      %c0_63 = arith.constant 0 : index
      %c0_64 = arith.constant 0 : index
      %c0_65 = arith.constant 0 : index
      %69 = vector.load %arg4[%c0_63, %c0_64, %c0_65] : memref<1x1x384xf32, #tpu.memory_space<vmem>>, vector<1x1x384xf32>
      tpu.vector_store %arg4[%c0_63, %c0_64, %c0_65], %68 {strides = array<i32>} : memref<1x1x384xf32, #tpu.memory_space<vmem>>, vector<1x1x384xf32>,
      %cst_66 = arith.constant 0.000000e+00 : f32
      %70 = vector.broadcast %cst_66 : f32 to vector<1x1x384xf32>
      %c0_67 = arith.constant 0 : index
      %c0_68 = arith.constant 0 : index
      %c0_69 = arith.constant 0 : index
      %71 = vector.load %arg5[%c0_67, %c0_68, %c0_69] : memref<1x1x384xf32, #tpu.memory_space<vmem>>, vector<1x1x384xf32>
      tpu.vector_store %arg5[%c0_67, %c0_68, %c0_69], %70 {strides = array<i32>} : memref<1x1x384xf32, #tpu.memory_space<vmem>>, vector<1x1x384xf32>,
    } else {
    }
    %c0_48 = arith.constant 0 : index
    %c0_49 = arith.constant 0 : index
    %c0_50 = arith.constant 0 : index
    %51 = vector.load %arg4[%c0_48, %c0_49, %c0_50] : memref<1x1x384xf32, #tpu.memory_space<vmem>>, vector<1x1x384xf32>
    %52 = vector.shape_cast %51 : vector<1x1x384xf32> to vector<1x384xf32>
    %cst_51 = arith.constant dense<0.000000e+00> : vector<384xf32>
    %53 = vector.multi_reduction <add>, %47, %cst_51 [0] : vector<64x384xf32> to vector<384xf32>
    %54 = vector.shape_cast %53 : vector<384xf32> to vector<1x384xf32>
    %55 = arith.addf %52, %54 : vector<1x384xf32>
    %c0_52 = arith.constant 0 : index
    %c0_53 = arith.constant 0 : index
    %c0_54 = arith.constant 0 : index
    %56 = vector.load %arg4[%c0_52, %c0_53, %c0_54] : memref<1x1x384xf32, #tpu.memory_space<vmem>>, vector<1x1x384xf32>
    %57 = vector.shape_cast %56 : vector<1x1x384xf32> to vector<1x384xf32>
    %58 = vector.shape_cast %55 : vector<1x384xf32> to vector<1x1x384xf32>
    tpu.vector_store %arg4[%c0_52, %c0_53, %c0_54], %58 {strides = array<i32>} : memref<1x1x384xf32, #tpu.memory_space<vmem>>, vector<1x1x384xf32>,
    %c0_55 = arith.constant 0 : index
    %c0_56 = arith.constant 0 : index
    %c0_57 = arith.constant 0 : index
    %59 = vector.load %arg5[%c0_55, %c0_56, %c0_57] : memref<1x1x384xf32, #tpu.memory_space<vmem>>, vector<1x1x384xf32>
    %60 = vector.shape_cast %59 : vector<1x1x384xf32> to vector<1x384xf32>
    %61 = arith.mulf %47, %47 : vector<64x384xf32>
    %cst_58 = arith.constant dense<0.000000e+00> : vector<384xf32>
    %62 = vector.multi_reduction <add>, %61, %cst_58 [0] : vector<64x384xf32> to vector<384xf32>
    %63 = vector.shape_cast %62 : vector<384xf32> to vector<1x384xf32>
    %64 = arith.addf %60, %63 : vector<1x384xf32>
    %c0_59 = arith.constant 0 : index
    %c0_60 = arith.constant 0 : index
    %c0_61 = arith.constant 0 : index
    %65 = vector.load %arg5[%c0_59, %c0_60, %c0_61] : memref<1x1x384xf32, #tpu.memory_space<vmem>>, vector<1x1x384xf32>
    %66 = vector.shape_cast %65 : vector<1x1x384xf32> to vector<1x384xf32>
    %67 = vector.shape_cast %64 : vector<1x384xf32> to vector<1x1x384xf32>
    tpu.vector_store %arg5[%c0_59, %c0_60, %c0_61], %67 {strides = array<i32>} : memref<1x1x384xf32, #tpu.memory_space<vmem>>, vector<1x1x384xf32>,
    return
  }
  func.func @transform_0(%arg0: i32, %arg1: i32) -> (i32, i32, i32, i32) {
    %c4_i32 = arith.constant 4 : i32
    %0 = arith.muli %arg0, %c4_i32 : i32
    %1 = arith.addi %0, %arg1 : i32
    %c0_i32 = arith.constant 0 : i32
    %c0_i32_0 = arith.constant 0 : i32
    %c0_i32_1 = arith.constant 0 : i32
    %c0_i32_2 = arith.constant 0 : i32
    return %1, %c0_i32, %c0_i32_0, %c0_i32_1 : i32, i32, i32, i32
  }
  func.func @transform_1(%arg0: i32, %arg1: i32) -> (i32, i32) {
    %c0_i32 = arith.constant 0 : i32
    %c0_i32_0 = arith.constant 0 : i32
    %c0_i32_1 = arith.constant 0 : i32
    return %c0_i32, %c0_i32_0 : i32, i32
  }
  func.func @transform_2(%arg0: i32, %arg1: i32) -> (i32, i32, i32) {
    %c0_i32 = arith.constant 0 : i32
    %c0_i32_0 = arith.constant 0 : i32
    %c0_i32_1 = arith.constant 0 : i32
    return %arg0, %c0_i32, %c0_i32_0 : i32, i32, i32
  }
  func.func @transform_3(%arg0: i32, %arg1: i32) -> (i32, i32, i32) {
    %c0_i32 = arith.constant 0 : i32
    %c0_i32_0 = arith.constant 0 : i32
    %c0_i32_1 = arith.constant 0 : i32
    return %arg0, %c0_i32, %c0_i32_0 : i32, i32, i32
  }
}

</mosaic_0001>

<llo_original>
// kernel: tpu_custom_call.1
$region0: #{tpu_custom_call.1}
  #allocation0 [shape = 'u32[]', space=smem, size = 0x4, offset = 0x4, fixed_abs, tag = 'smem constant byte address 0x4 - core index']
  #allocation1 [shape = 'u32[144,128]{1,0:T(1,128)}', space=vmem, size = 0x12000, scoped, tag = 'internal scratch']
  #allocation2 [shape = 'bf16[64,36]{1,0:T(8,128)(2,1)}', space=vmem, size = 0x4000, scoped, tag = 'scratch operand']
  %s0 = inlined_call_operand.vmem [shape: f32[8,6,18,4], index: 0, kind: input, shape index: {}]
  %s1 = inlined_call_operand.vmem [shape: bf16[36,384], index: 1, kind: input, shape index: {}]
  %s2 = inlined_call_operand.hbm [shape: f32[2,1,384], index: 2, kind: output, shape index: {0}]
  %s3 = inlined_call_operand.hbm [shape: f32[2,1,384], index: 3, kind: output, shape index: {1}]
  %4 = xla_tuple %s2, %s3
  %s5 = sld [smem:[#allocation0]]
  $region53: #{tpu_custom_call.1} parent=0
    _
  %s7 = ssub.s32 1, %s5
  %s8 = scalar_select 0, %s7, %s5
  $region1: #{tpu_custom_call.1} parent=0
    #allocation3 [shape = 'u8[3072]{0}', space=vmem, size = 0xc00, scoped, tag = 'output window, operand 0']
    #allocation4 [shape = 's32[2]{0}', space=sflag, size = 0x8, scoped, tag = 'scoped memory for tpu_custom_call.1']
    #allocation5 [shape = 'u8[3072]{0}', space=vmem, size = 0xc00, scoped, tag = 'output window, operand 1']
    #allocation6 [shape = 's32[2]{0}', space=sflag, size = 0x8, scoped, tag = 'scoped memory for tpu_custom_call.1']
    %9 = vsyncpa [#allocation4], 0
    %s10 = scalar_lea.sflag [#allocation4], 1
    %11 = vsyncpa %s10, 0
    %12 = vsyncpa [#allocation6], 0
    %s13 = scalar_lea.sflag [#allocation6], 1
    %14 = vsyncpa %s13, 0
    loop: start=0, step=1, limit=10
    $region2: #{tpu_custom_call.1} parent=1 // loop_pre_header
      _
    $region3: #{tpu_custom_call.1} parent=1 // loop_header
      %s16 = sphi 0, %s20
      %p17 = scmp.ge.s32.totalorder %s16, 10
      %s23 = sphi 0, %s35
      %s24 = sphi 0, %s31
      %s25 = sphi 0, %s23
      %s26 = sphi 0, %s24
      %s27 = sphi 0, %s25
      %s28 = sphi 0, %s26
      %s42 = sphi 0, %s44
      %s45 = sphi 0, %s42
      %s46 = sphi 0, %s45
      %s62 = sphi 0, %s46
      %s66 = sphi 0, %s66
      %s68 = sphi 0, %s66
      %s69 = sphi 0, %s68
      %s83 = sphi 0, %s69
      %s89 = sphi 0, %s91
      %s92 = sphi 0, %s89
      %s93 = sphi 0, %s92
      %s109 = sphi 0, %s93
      %s115 = sphi 0, %s117
      %s118 = sphi 0, %s115
      %s119 = sphi 0, %s118
      %s135 = sphi 0, %s119
    $region4: #{tpu_custom_call.1} parent=1 // loop_header_branch
      %19 = sbr.rel (%p17) target = $region8
    $region5: #{tpu_custom_call.1} parent=1 // loop_body
      %s21 = ssub.s32 %s16, 1
      %s22 = ssub.s32 %s16, 2
      %s29 = sadd.s32 1, %s24
      %p30 = scmp.ge.s32.totalorder %s29, 4
      %s31 = scalar_select %p30, 0, %s29
      %s32 = sadd.s32 1, %s23
      %s33 = scalar_select %p30, %s32, %s23
      %p34 = scmp.ge.s32.totalorder %s33, 2
      %s35 = scalar_select %p34, 0, %s33
      %s36 = smul.u32 %s23, 4
      %s37 = sadd.s32 %s36, %s24
      %s38 = smul.u32 %s35, 4
      %s39 = sadd.s32 %s38, %s31
      %s40 = ssub.s32 %s37, %s39
      %p41 = scmp.eq.s32.totalorder %s40, 0
      %s43 = sadd.s32 %s42, 1
      %s44 = scalar_select %p41, %s42, %s43
      %p47 = pneg %p41
      %p48 = scmp.eq.s32.totalorder %s16, 7
      %p49 = por %p47, %p48
      %p50 = scmp.ne.s32.totalorder %s42, %s45
      %p51 = scmp.eq.s32.totalorder %s16, 0
      %p52 = por %p50, %p51
      %p53 = scmp.ne.s32.totalorder %s42, %s45
      %p54 = scmp.eq.s32.totalorder %s21, 7
      %p55 = por %p53, %p54
      %p56 = scmp.ne.s32.totalorder %s45, %s46
      %p57 = scmp.eq.s32.totalorder %s21, 0
      %p58 = por %p56, %p57
      %p59 = scmp.ne.s32.totalorder %s45, %s46
      %p60 = scmp.eq.s32.totalorder %s22, 7
      %p61 = por %p59, %p60
      %p63 = scmp.ne.s32.totalorder %s46, %s62
      %p64 = scmp.eq.s32.totalorder %s22, 0
      %p65 = por %p63, %p64
      %s67 = sadd.s32 %s66, 1
      %p70 = scmp.eq.s32.totalorder %s16, 7
      %p71 = scmp.ne.s32.totalorder %s66, %s68
      %p72 = scmp.eq.s32.totalorder %s16, 0
      %p73 = por %p71, %p72
      %p74 = scmp.ne.s32.totalorder %s66, %s68
      %p75 = scmp.eq.s32.totalorder %s21, 7
      %p76 = por %p74, %p75
      %p77 = scmp.ne.s32.totalorder %s68, %s69
      %p78 = scmp.eq.s32.totalorder %s21, 0
      %p79 = por %p77, %p78
      %p80 = scmp.ne.s32.totalorder %s68, %s69
      %p81 = scmp.eq.s32.totalorder %s22, 7
      %p82 = por %p80, %p81
      %p84 = scmp.ne.s32.totalorder %s69, %s83
      %p85 = scmp.eq.s32.totalorder %s22, 0
      %p86 = por %p84, %p85
      %s87 = ssub.s32 %s23, %s35
      %p88 = scmp.eq.s32.totalorder %s87, 0
      %s90 = sadd.s32 %s89, 1
      %s91 = scalar_select %p88, %s89, %s90
      %p94 = pneg %p88
      %p95 = scmp.eq.s32.totalorder %s16, 7
      %p96 = por %p94, %p95
      %p97 = scmp.ne.s32.totalorder %s89, %s92
      %p98 = scmp.eq.s32.totalorder %s16, 0
      %p99 = por %p97, %p98
      %p100 = scmp.ne.s32.totalorder %s89, %s92
      %p101 = scmp.eq.s32.totalorder %s21, 7
      %p102 = por %p100, %p101
      %p103 = scmp.ne.s32.totalorder %s92, %s93
      %p104 = scmp.eq.s32.totalorder %s21, 0
      %p105 = por %p103, %p104
      %p106 = scmp.ne.s32.totalorder %s92, %s93
      %p107 = scmp.eq.s32.totalorder %s22, 7
      %p108 = por %p106, %p107
      %p110 = scmp.ne.s32.totalorder %s93, %s109
      %p111 = scmp.eq.s32.totalorder %s22, 0
      %p112 = por %p110, %p111
      %s113 = ssub.s32 %s23, %s35
      %p114 = scmp.eq.s32.totalorder %s113, 0
      %s116 = sadd.s32 %s115, 1
      %s117 = scalar_select %p114, %s115, %s116
      %p120 = pneg %p114
      %p121 = scmp.eq.s32.totalorder %s16, 7
      %p122 = por %p120, %p121
      %p123 = scmp.ne.s32.totalorder %s115, %s118
      %p124 = scmp.eq.s32.totalorder %s16, 0
      %p125 = por %p123, %p124
      %p126 = scmp.ne.s32.totalorder %s115, %s118
      %p127 = scmp.eq.s32.totalorder %s21, 7
      %p128 = por %p126, %p127
      %p129 = scmp.ne.s32.totalorder %s118, %s119
      %p130 = scmp.eq.s32.totalorder %s21, 0
      %p131 = por %p129, %p130
      %p132 = scmp.ne.s32.totalorder %s118, %s119
      %p133 = scmp.eq.s32.totalorder %s22, 7
      %p134 = por %p132, %p133
      %p136 = scmp.ne.s32.totalorder %s119, %s135
      %p137 = scmp.eq.s32.totalorder %s22, 0
      %p138 = por %p136, %p137
      %p139 = scmp.le.s32.totalorder 1, %s16
      %p140 = scmp.lt.s32.totalorder %s16, 9
      %p141 = pnand %p139, %p140
      %p142 = pneg %p141
      // Predicated region
      $region9: #{tpu_custom_call.1} parent=5 // pred_check
        _
      $region10: #{tpu_custom_call.1} parent=5 // pred_check_branch
        %144 = sbr.rel (%p141) target = $region12
      $region11: #{tpu_custom_call.1} parent=5 // pred_region
        %s145 = ssub.s32 %s16, 1
        // Predicated region
        $region13: #{tpu_custom_call.1} parent=11 // pred_check
          %p146 = pneg %p79
        $region14: #{tpu_custom_call.1} parent=11 // pred_check_branch
          %148 = sbr.rel (%p146) target = $region16
        $region15: #{tpu_custom_call.1} parent=11 // pred_region
          _
        $region16: #{tpu_custom_call.1} parent=11 // pred_fallthru
          _
      $region12: #{tpu_custom_call.1} parent=5 // pred_fallthru
        _
      %p149 = scmp.lt.s32.totalorder %s16, 8
      // Predicated region
      $region17: #{tpu_custom_call.1} parent=5 // pred_check
        %p150 = pneg %p149
      $region18: #{tpu_custom_call.1} parent=5 // pred_check_branch
        %152 = sbr.rel (%p150) target = $region20
      $region19: #{tpu_custom_call.1} parent=5 // pred_region
        // Predicated region
        $region21: #{tpu_custom_call.1} parent=19 // pred_check
          %p153 = pneg %p52
        $region22: #{tpu_custom_call.1} parent=19 // pred_check_branch
          %155 = sbr.rel (%p153) target = $region24
        $region23: #{tpu_custom_call.1} parent=19 // pred_region
          %s156 = smul.u32 %s23, 4
          %s157 = sadd.s32 %s156, %s24
          %p158 = scmp.lt.s32.totalorder %s157, 7
          %s159 = scalar_select %p158, %s157, 7
          %s160 = smul.addr %s159, 18
          %s161 = smul.addr %s160, 8
          %s162 = scalar_lea.vmem %s0, %s161
          %s163 = smul.u32 %s23, 4
          %s164 = sadd.s32 %s163, %s24
        $region24: #{tpu_custom_call.1} parent=19 // pred_fallthru
          _
      $region20: #{tpu_custom_call.1} parent=5 // pred_fallthru
        _
      %p165 = scmp.le.s32.totalorder 1, %s16
      %p166 = scmp.lt.s32.totalorder %s16, 9
      %p167 = pnand %p165, %p166
      %p168 = pneg %p167
      // Predicated region
      $region25: #{tpu_custom_call.1} parent=5 // pred_check
        _
      $region26: #{tpu_custom_call.1} parent=5 // pred_check_branch
        %170 = sbr.rel (%p167) target = $region28
      $region27: #{tpu_custom_call.1} parent=5 // pred_region
        %s171 = ssub.s32 %s16, 1
        %s172 = smul.u32 %s25, 4
        %s173 = sadd.s32 %s172, %s26
        %p174 = scmp.lt.s32.totalorder %s173, 7
        %s175 = scalar_select %p174, %s173, 7
        %s176 = smul.addr %s175, 18
        %s177 = smul.addr %s176, 8
        %s178 = scalar_lea.vmem %s0, %s177
        %p179 = pneg %p58
        %p180 = pneg %p55
        %p181 = pneg %p79
        %p182 = pneg %p76
        %p183 = pneg %p105
        %p184 = pneg %p102
        %s185 = sand.u32 %s92, 1
        %s186 = scalar_lea.sflag [#allocation4], %s185
        %s187 = sand.u32 %s92, 1
        %s188 = smul.addr %s187, 3
        %s189 = scalar_lea.vmem [#allocation3], %s188
        %p190 = pneg %p131
        %p191 = pneg %p128
        %s192 = sand.u32 %s118, 1
        %s193 = scalar_lea.sflag [#allocation6], %s192
        %s194 = sand.u32 %s118, 1
        %s195 = smul.addr %s194, 3
        %s196 = scalar_lea.vmem [#allocation5], %s195
        %s197 = smul.u32 %s25, 4
        %s198 = sadd.s32 %s197, %s26
        %p199 = scmp.lt.s32.totalorder %s198, 7
        %s200 = scalar_select %p199, %s198, 7
        %s201 = smul.addr %s200, 18
        %s202 = smul.addr %s201, 8
        %s203 = scalar_lea.vmem %s0, %s202
        %s204 = smul.u32 %s25, 4
        %s205 = sadd.s32 %s204, %s26
        %v207 = vld [vmem:[%s203] sm:$0xff]
        %v208 = vld [vmem:[%s203 + $0x8] sm:$0xff]
        %v209 = vld [vmem:[%s203 + $0x18] sm:$0xff]
        %v210 = vld [vmem:[%s203 + $0x20] sm:$0xff]
        %v211 = vld [vmem:[%s203 + $0x30] sm:$0xff]
        %v212 = vld [vmem:[%s203 + $0x38] sm:$0xff]
        %v213 = vld [vmem:[%s203 + $0x48] sm:$0xff]
        %v214 = vld [vmem:[%s203 + $0x50] sm:$0xff]
        %v215 = vpack.c.bf16 %v208, %v207
        %v216 = vpack.c.bf16 %v210, %v209
        %v217 = vpack.c.bf16 %v212, %v211
        %v218 = vpack.c.bf16 %v214, %v213
        %v223 = vunpack.c.l.b16 %v215
        %v224 = vunpack.c.h.b16 %v215
        %v225 = vunpack.c.l.b16 %v216
        %v226 = vunpack.c.h.b16 %v216
        %v227 = vunpack.c.l.b16 %v217
        %v228 = vunpack.c.h.b16 %v217
        %v229 = vunpack.c.l.b16 %v218
        %v230 = vunpack.c.h.b16 %v218
        %v231 = vpack.c.b16 %v223, %v223
        %v232 = vpack.c.b16 %v224, %v224
        %v233 = vpack.c.b16 %v225, %v225
        %v234 = vpack.c.b16 %v226, %v226
        %v235 = vpack.c.b16 %v227, %v227
        %v236 = vpack.c.b16 %v228, %v228
        %v237 = vpack.c.b16 %v229, %v229
        %v238 = vpack.c.b16 %v230, %v230
        %vm247 = vcmask 27648
        %248 = vst.msk [vmem:[#allocation2] sm:$0xf] %vm247, %v231
        %249 = vst.msk [vmem:[#allocation2 + $0x4] sm:$0xf] %vm247, %v232
        %250 = vst.msk [vmem:[#allocation2 + $0x8] sm:$0xf] %vm247, %v233
        %251 = vst.msk [vmem:[#allocation2 + $0xc] sm:$0xf] %vm247, %v234
        %252 = vst.msk [vmem:[#allocation2 + $0x10] sm:$0xf] %vm247, %v235
        %253 = vst.msk [vmem:[#allocation2 + $0x14] sm:$0xf] %vm247, %v236
        %254 = vst.msk [vmem:[#allocation2 + $0x18] sm:$0xf] %vm247, %v237
        %255 = vst.msk [vmem:[#allocation2 + $0x1c] sm:$0xf] %vm247, %v238
        %v256 = vld [vmem:[%s203 + $0x1] sm:$0xff]
        %v257 = vld [vmem:[%s203 + $0x9] sm:$0xff]
        %v258 = vld [vmem:[%s203 + $0x19] sm:$0xff]
        %v259 = vld [vmem:[%s203 + $0x21] sm:$0xff]
        %v260 = vld [vmem:[%s203 + $0x31] sm:$0xff]
        %v261 = vld [vmem:[%s203 + $0x39] sm:$0xff]
        %v262 = vld [vmem:[%s203 + $0x49] sm:$0xff]
        %v263 = vld [vmem:[%s203 + $0x51] sm:$0xff]
        %v264 = vpack.c.bf16 %v257, %v256
        %v265 = vpack.c.bf16 %v259, %v258
        %v266 = vpack.c.bf16 %v261, %v260
        %v267 = vpack.c.bf16 %v263, %v262
        %v272 = vunpack.c.l.b16 %v264
        %v273 = vunpack.c.h.b16 %v264
        %v274 = vunpack.c.l.b16 %v265
        %v275 = vunpack.c.h.b16 %v265
        %v276 = vunpack.c.l.b16 %v266
        %v277 = vunpack.c.h.b16 %v266
        %v278 = vunpack.c.l.b16 %v267
        %v279 = vunpack.c.h.b16 %v267
        %v280 = vpack.c.b16 %v272, %v272
        %v281 = vpack.c.b16 %v273, %v273
        %v282 = vpack.c.b16 %v274, %v274
        %v283 = vpack.c.b16 %v275, %v275
        %v284 = vpack.c.b16 %v276, %v276
        %v285 = vpack.c.b16 %v277, %v277
        %v286 = vpack.c.b16 %v278, %v278
        %v287 = vpack.c.b16 %v279, %v279
        %288 = vrot.lane.b32.xlu0 %v280, 4
        %v289 = vpop.permute.xlu0 %288
        %290 = vrot.lane.b32.xlu0 %v281, 4
        %v291 = vpop.permute.xlu0 %290
        %292 = vrot.lane.b32.xlu0 %v282, 4
        %v293 = vpop.permute.xlu0 %292
        %294 = vrot.lane.b32.xlu0 %v283, 4
        %v295 = vpop.permute.xlu0 %294
        %296 = vrot.lane.b32.xlu0 %v284, 4
        %v297 = vpop.permute.xlu0 %296
        %298 = vrot.lane.b32.xlu0 %v285, 4
        %v299 = vpop.permute.xlu0 %298
        %300 = vrot.lane.b32.xlu0 %v286, 4
        %v301 = vpop.permute.xlu0 %300
        %302 = vrot.lane.b32.xlu0 %v287, 4
        %v303 = vpop.permute.xlu0 %302
        %vm312 = vcmask 60448
        %313 = vst.msk [vmem:[#allocation2] sm:$0xf] %vm312, %v289
        %314 = vst.msk [vmem:[#allocation2 + $0x4] sm:$0xf] %vm312, %v291
        %315 = vst.msk [vmem:[#allocation2 + $0x8] sm:$0xf] %vm312, %v293
        %316 = vst.msk [vmem:[#allocation2 + $0xc] sm:$0xf] %vm312, %v295
        %317 = vst.msk [vmem:[#allocation2 + $0x10] sm:$0xf] %vm312, %v297
        %318 = vst.msk [vmem:[#allocation2 + $0x14] sm:$0xf] %vm312, %v299
        %319 = vst.msk [vmem:[#allocation2 + $0x18] sm:$0xf] %vm312, %v301
        %320 = vst.msk [vmem:[#allocation2 + $0x1c] sm:$0xf] %vm312, %v303
        %v321 = vld [vmem:[%s203 + $0x2] sm:$0xff]
        %v322 = vld [vmem:[%s203 + $0xa] sm:$0xff]
        %v323 = vld [vmem:[%s203 + $0x1a] sm:$0xff]
        %v324 = vld [vmem:[%s203 + $0x22] sm:$0xff]
        %v325 = vld [vmem:[%s203 + $0x32] sm:$0xff]
        %v326 = vld [vmem:[%s203 + $0x3a] sm:$0xff]
        %v327 = vld [vmem:[%s203 + $0x4a] sm:$0xff]
        %v328 = vld [vmem:[%s203 + $0x52] sm:$0xff]
        %v329 = vpack.c.bf16 %v322, %v321
        %v330 = vpack.c.bf16 %v324, %v323
        %v331 = vpack.c.bf16 %v326, %v325
        %v332 = vpack.c.bf16 %v328, %v327
        %v337 = vunpack.c.l.b16 %v329
        %v338 = vunpack.c.h.b16 %v329
        %v339 = vunpack.c.l.b16 %v330
        %v340 = vunpack.c.h.b16 %v330
        %v341 = vunpack.c.l.b16 %v331
        %v342 = vunpack.c.h.b16 %v331
        %v343 = vunpack.c.l.b16 %v332
        %v344 = vunpack.c.h.b16 %v332
        %v345 = vpack.c.b16 %v337, %v337
        %v346 = vpack.c.b16 %v338, %v338
        %v347 = vpack.c.b16 %v339, %v339
        %v348 = vpack.c.b16 %v340, %v340
        %v349 = vpack.c.b16 %v341, %v341
        %v350 = vpack.c.b16 %v342, %v342
        %v351 = vpack.c.b16 %v343, %v343
        %v352 = vpack.c.b16 %v344, %v344
        %353 = vrot.lane.b32.xlu0 %v345, 8
        %v354 = vpop.permute.xlu0 %353
        %355 = vrot.lane.b32.xlu0 %v346, 8
        %v356 = vpop.permute.xlu0 %355
        %357 = vrot.lane.b32.xlu0 %v347, 8
        %v358 = vpop.permute.xlu0 %357
        %359 = vrot.lane.b32.xlu0 %v348, 8
        %v360 = vpop.permute.xlu0 %359
        %361 = vrot.lane.b32.xlu0 %v349, 8
        %v362 = vpop.permute.xlu0 %361
        %363 = vrot.lane.b32.xlu0 %v350, 8
        %v364 = vpop.permute.xlu0 %363
        %365 = vrot.lane.b32.xlu0 %v351, 8
        %v366 = vpop.permute.xlu0 %365
        %367 = vrot.lane.b32.xlu0 %v352, 8
        %v368 = vpop.permute.xlu0 %367
        %vm377 = vcmask 93248
        %378 = vst.msk [vmem:[#allocation2] sm:$0xf] %vm377, %v354
        %379 = vst.msk [vmem:[#allocation2 + $0x4] sm:$0xf] %vm377, %v356
        %380 = vst.msk [vmem:[#allocation2 + $0x8] sm:$0xf] %vm377, %v358
        %381 = vst.msk [vmem:[#allocation2 + $0xc] sm:$0xf] %vm377, %v360
        %382 = vst.msk [vmem:[#allocation2 + $0x10] sm:$0xf] %vm377, %v362
        %383 = vst.msk [vmem:[#allocation2 + $0x14] sm:$0xf] %vm377, %v364
        %384 = vst.msk [vmem:[#allocation2 + $0x18] sm:$0xf] %vm377, %v366
        %385 = vst.msk [vmem:[#allocation2 + $0x1c] sm:$0xf] %vm377, %v368
        %s386 = scalar_lea.vmem %s203, 24
        %v387 = vld [vmem:[%s386] sm:$0xff]
        %v388 = vld [vmem:[%s386 + $0x8] sm:$0xff]
        %v389 = vld [vmem:[%s386 + $0x18] sm:$0xff]
        %v390 = vld [vmem:[%s386 + $0x20] sm:$0xff]
        %v391 = vld [vmem:[%s386 + $0x30] sm:$0xff]
        %v392 = vld [vmem:[%s386 + $0x38] sm:$0xff]
        %v393 = vld [vmem:[%s386 + $0x48] sm:$0xff]
        %v394 = vld [vmem:[%s386 + $0x50] sm:$0xff]
        %v395 = vpack.c.bf16 %v388, %v387
        %v396 = vpack.c.bf16 %v390, %v389
        %v397 = vpack.c.bf16 %v392, %v391
        %v398 = vpack.c.bf16 %v394, %v393
        %v403 = vunpack.c.l.b16 %v395
        %v404 = vunpack.c.h.b16 %v395
        %v405 = vunpack.c.l.b16 %v396
        %v406 = vunpack.c.h.b16 %v396
        %v407 = vunpack.c.l.b16 %v397
        %v408 = vunpack.c.h.b16 %v397
        %v409 = vunpack.c.l.b16 %v398
        %v410 = vunpack.c.h.b16 %v398
        %v411 = vpack.c.b16 %v403, %v403
        %v412 = vpack.c.b16 %v404, %v404
        %v413 = vpack.c.b16 %v405, %v405
        %v414 = vpack.c.b16 %v406, %v406
        %v415 = vpack.c.b16 %v407, %v407
        %v416 = vpack.c.b16 %v408, %v408
        %v417 = vpack.c.b16 %v409, %v409
        %v418 = vpack.c.b16 %v410, %v410
        %419 = vrot.lane.b32.xlu0 %v411, 12
        %v420 = vpop.permute.xlu0 %419
        %421 = vrot.lane.b32.xlu0 %v412, 12
        %v422 = vpop.permute.xlu0 %421
        %423 = vrot.lane.b32.xlu0 %v413, 12
        %v424 = vpop.permute.xlu0 %423
        %425 = vrot.lane.b32.xlu0 %v414, 12
        %v426 = vpop.permute.xlu0 %425
        %427 = vrot.lane.b32.xlu0 %v415, 12
        %v428 = vpop.permute.xlu0 %427
        %429 = vrot.lane.b32.xlu0 %v416, 12
        %v430 = vpop.permute.xlu0 %429
        %431 = vrot.lane.b32.xlu0 %v417, 12
        %v432 = vpop.permute.xlu0 %431
        %433 = vrot.lane.b32.xlu0 %v418, 12
        %v434 = vpop.permute.xlu0 %433
        %vm443 = vcmask 126048
        %444 = vst.msk [vmem:[#allocation2] sm:$0xf] %vm443, %v420
        %445 = vst.msk [vmem:[#allocation2 + $0x4] sm:$0xf] %vm443, %v422
        %446 = vst.msk [vmem:[#allocation2 + $0x8] sm:$0xf] %vm443, %v424
        %447 = vst.msk [vmem:[#allocation2 + $0xc] sm:$0xf] %vm443, %v426
        %448 = vst.msk [vmem:[#allocation2 + $0x10] sm:$0xf] %vm443, %v428
        %449 = vst.msk [vmem:[#allocation2 + $0x14] sm:$0xf] %vm443, %v430
        %450 = vst.msk [vmem:[#allocation2 + $0x18] sm:$0xf] %vm443, %v432
        %451 = vst.msk [vmem:[#allocation2 + $0x1c] sm:$0xf] %vm443, %v434
        %v452 = vld [vmem:[%s386 + $0x1] sm:$0xff]
        %v453 = vld [vmem:[%s386 + $0x9] sm:$0xff]
        %v454 = vld [vmem:[%s386 + $0x19] sm:$0xff]
        %v455 = vld [vmem:[%s386 + $0x21] sm:$0xff]
        %v456 = vld [vmem:[%s386 + $0x31] sm:$0xff]
        %v457 = vld [vmem:[%s386 + $0x39] sm:$0xff]
        %v458 = vld [vmem:[%s386 + $0x49] sm:$0xff]
        %v459 = vld [vmem:[%s386 + $0x51] sm:$0xff]
        %v460 = vpack.c.bf16 %v453, %v452
        %v461 = vpack.c.bf16 %v455, %v454
        %v462 = vpack.c.bf16 %v457, %v456
        %v463 = vpack.c.bf16 %v459, %v458
        %v468 = vunpack.c.l.b16 %v460
        %v469 = vunpack.c.h.b16 %v460
        %v470 = vunpack.c.l.b16 %v461
        %v471 = vunpack.c.h.b16 %v461
        %v472 = vunpack.c.l.b16 %v462
        %v473 = vunpack.c.h.b16 %v462
        %v474 = vunpack.c.l.b16 %v463
        %v475 = vunpack.c.h.b16 %v463
        %v476 = vpack.c.b16 %v468, %v468
        %v477 = vpack.c.b16 %v469, %v469
        %v478 = vpack.c.b16 %v470, %v470
        %v479 = vpack.c.b16 %v471, %v471
        %v480 = vpack.c.b16 %v472, %v472
        %v481 = vpack.c.b16 %v473, %v473
        %v482 = vpack.c.b16 %v474, %v474
        %v483 = vpack.c.b16 %v475, %v475
        %484 = vrot.lane.b32.xlu0 %v476, 16
        %v485 = vpop.permute.xlu0 %484
        %486 = vrot.lane.b32.xlu0 %v477, 16
        %v487 = vpop.permute.xlu0 %486
        %488 = vrot.lane.b32.xlu0 %v478, 16
        %v489 = vpop.permute.xlu0 %488
        %490 = vrot.lane.b32.xlu0 %v479, 16
        %v491 = vpop.permute.xlu0 %490
        %492 = vrot.lane.b32.xlu0 %v480, 16
        %v493 = vpop.permute.xlu0 %492
        %494 = vrot.lane.b32.xlu0 %v481, 16
        %v495 = vpop.permute.xlu0 %494
        %496 = vrot.lane.b32.xlu0 %v482, 16
        %v497 = vpop.permute.xlu0 %496
        %498 = vrot.lane.b32.xlu0 %v483, 16
        %v499 = vpop.permute.xlu0 %498
        %vm508 = vcmask 158848
        %509 = vst.msk [vmem:[#allocation2] sm:$0xf] %vm508, %v485
        %510 = vst.msk [vmem:[#allocation2 + $0x4] sm:$0xf] %vm508, %v487
        %511 = vst.msk [vmem:[#allocation2 + $0x8] sm:$0xf] %vm508, %v489
        %512 = vst.msk [vmem:[#allocation2 + $0xc] sm:$0xf] %vm508, %v491
        %513 = vst.msk [vmem:[#allocation2 + $0x10] sm:$0xf] %vm508, %v493
        %514 = vst.msk [vmem:[#allocation2 + $0x14] sm:$0xf] %vm508, %v495
        %515 = vst.msk [vmem:[#allocation2 + $0x18] sm:$0xf] %vm508, %v497
        %516 = vst.msk [vmem:[#allocation2 + $0x1c] sm:$0xf] %vm508, %v499
        %v517 = vld [vmem:[%s386 + $0x2] sm:$0xff]
        %v518 = vld [vmem:[%s386 + $0xa] sm:$0xff]
        %v519 = vld [vmem:[%s386 + $0x1a] sm:$0xff]
        %v520 = vld [vmem:[%s386 + $0x22] sm:$0xff]
        %v521 = vld [vmem:[%s386 + $0x32] sm:$0xff]
        %v522 = vld [vmem:[%s386 + $0x3a] sm:$0xff]
        %v523 = vld [vmem:[%s386 + $0x4a] sm:$0xff]
        %v524 = vld [vmem:[%s386 + $0x52] sm:$0xff]
        %v525 = vpack.c.bf16 %v518, %v517
        %v526 = vpack.c.bf16 %v520, %v519
        %v527 = vpack.c.bf16 %v522, %v521
        %v528 = vpack.c.bf16 %v524, %v523
        %v533 = vunpack.c.l.b16 %v525
        %v534 = vunpack.c.h.b16 %v525
        %v535 = vunpack.c.l.b16 %v526
        %v536 = vunpack.c.h.b16 %v526
        %v537 = vunpack.c.l.b16 %v527
        %v538 = vunpack.c.h.b16 %v527
        %v539 = vunpack.c.l.b16 %v528
        %v540 = vunpack.c.h.b16 %v528
        %v541 = vpack.c.b16 %v533, %v533
        %v542 = vpack.c.b16 %v534, %v534
        %v543 = vpack.c.b16 %v535, %v535
        %v544 = vpack.c.b16 %v536, %v536
        %v545 = vpack.c.b16 %v537, %v537
        %v546 = vpack.c.b16 %v538, %v538
        %v547 = vpack.c.b16 %v539, %v539
        %v548 = vpack.c.b16 %v540, %v540
        %549 = vrot.lane.b32.xlu0 %v541, 20
        %v550 = vpop.permute.xlu0 %549
        %551 = vrot.lane.b32.xlu0 %v542, 20
        %v552 = vpop.permute.xlu0 %551
        %553 = vrot.lane.b32.xlu0 %v543, 20
        %v554 = vpop.permute.xlu0 %553
        %555 = vrot.lane.b32.xlu0 %v544, 20
        %v556 = vpop.permute.xlu0 %555
        %557 = vrot.lane.b32.xlu0 %v545, 20
        %v558 = vpop.permute.xlu0 %557
        %559 = vrot.lane.b32.xlu0 %v546, 20
        %v560 = vpop.permute.xlu0 %559
        %561 = vrot.lane.b32.xlu0 %v547, 20
        %v562 = vpop.permute.xlu0 %561
        %563 = vrot.lane.b32.xlu0 %v548, 20
        %v564 = vpop.permute.xlu0 %563
        %vm573 = vcmask 191648
        %574 = vst.msk [vmem:[#allocation2] sm:$0xf] %vm573, %v550
        %575 = vst.msk [vmem:[#allocation2 + $0x4] sm:$0xf] %vm573, %v552
        %576 = vst.msk [vmem:[#allocation2 + $0x8] sm:$0xf] %vm573, %v554
        %577 = vst.msk [vmem:[#allocation2 + $0xc] sm:$0xf] %vm573, %v556
        %578 = vst.msk [vmem:[#allocation2 + $0x10] sm:$0xf] %vm573, %v558
        %579 = vst.msk [vmem:[#allocation2 + $0x14] sm:$0xf] %vm573, %v560
        %580 = vst.msk [vmem:[#allocation2 + $0x18] sm:$0xf] %vm573, %v562
        %581 = vst.msk [vmem:[#allocation2 + $0x1c] sm:$0xf] %vm573, %v564
        %s582 = scalar_lea.vmem %s203, 48
        %v583 = vld [vmem:[%s582] sm:$0xff]
        %v584 = vld [vmem:[%s582 + $0x8] sm:$0xff]
        %v585 = vld [vmem:[%s582 + $0x18] sm:$0xff]
        %v586 = vld [vmem:[%s582 + $0x20] sm:$0xff]
        %v587 = vld [vmem:[%s582 + $0x30] sm:$0xff]
        %v588 = vld [vmem:[%s582 + $0x38] sm:$0xff]
        %v589 = vld [vmem:[%s582 + $0x48] sm:$0xff]
        %v590 = vld [vmem:[%s582 + $0x50] sm:$0xff]
        %v591 = vpack.c.bf16 %v584, %v583
        %v592 = vpack.c.bf16 %v586, %v585
        %v593 = vpack.c.bf16 %v588, %v587
        %v594 = vpack.c.bf16 %v590, %v589
        %v599 = vunpack.c.l.b16 %v591
        %v600 = vunpack.c.h.b16 %v591
        %v601 = vunpack.c.l.b16 %v592
        %v602 = vunpack.c.h.b16 %v592
        %v603 = vunpack.c.l.b16 %v593
        %v604 = vunpack.c.h.b16 %v593
        %v605 = vunpack.c.l.b16 %v594
        %v606 = vunpack.c.h.b16 %v594
        %v607 = vpack.c.b16 %v599, %v599
        %v608 = vpack.c.b16 %v600, %v600
        %v609 = vpack.c.b16 %v601, %v601
        %v610 = vpack.c.b16 %v602, %v602
        %v611 = vpack.c.b16 %v603, %v603
        %v612 = vpack.c.b16 %v604, %v604
        %v613 = vpack.c.b16 %v605, %v605
        %v614 = vpack.c.b16 %v606, %v606
        %615 = vrot.lane.b32.xlu0 %v607, 24
        %v616 = vpop.permute.xlu0 %615
        %617 = vrot.lane.b32.xlu0 %v608, 24
        %v618 = vpop.permute.xlu0 %617
        %619 = vrot.lane.b32.xlu0 %v609, 24
        %v620 = vpop.permute.xlu0 %619
        %621 = vrot.lane.b32.xlu0 %v610, 24
        %v622 = vpop.permute.xlu0 %621
        %623 = vrot.lane.b32.xlu0 %v611, 24
        %v624 = vpop.permute.xlu0 %623
        %625 = vrot.lane.b32.xlu0 %v612, 24
        %v626 = vpop.permute.xlu0 %625
        %627 = vrot.lane.b32.xlu0 %v613, 24
        %v628 = vpop.permute.xlu0 %627
        %629 = vrot.lane.b32.xlu0 %v614, 24
        %v630 = vpop.permute.xlu0 %629
        %vm639 = vcmask 224448
        %640 = vst.msk [vmem:[#allocation2] sm:$0xf] %vm639, %v616
        %641 = vst.msk [vmem:[#allocation2 + $0x4] sm:$0xf] %vm639, %v618
        %642 = vst.msk [vmem:[#allocation2 + $0x8] sm:$0xf] %vm639, %v620
        %643 = vst.msk [vmem:[#allocation2 + $0xc] sm:$0xf] %vm639, %v622
        %644 = vst.msk [vmem:[#allocation2 + $0x10] sm:$0xf] %vm639, %v624
        %645 = vst.msk [vmem:[#allocation2 + $0x14] sm:$0xf] %vm639, %v626
        %646 = vst.msk [vmem:[#allocation2 + $0x18] sm:$0xf] %vm639, %v628
        %647 = vst.msk [vmem:[#allocation2 + $0x1c] sm:$0xf] %vm639, %v630
        %v648 = vld [vmem:[%s582 + $0x1] sm:$0xff]
        %v649 = vld [vmem:[%s582 + $0x9] sm:$0xff]
        %v650 = vld [vmem:[%s582 + $0x19] sm:$0xff]
        %v651 = vld [vmem:[%s582 + $0x21] sm:$0xff]
        %v652 = vld [vmem:[%s582 + $0x31] sm:$0xff]
        %v653 = vld [vmem:[%s582 + $0x39] sm:$0xff]
        %v654 = vld [vmem:[%s582 + $0x49] sm:$0xff]
        %v655 = vld [vmem:[%s582 + $0x51] sm:$0xff]
        %v656 = vpack.c.bf16 %v649, %v648
        %v657 = vpack.c.bf16 %v651, %v650
        %v658 = vpack.c.bf16 %v653, %v652
        %v659 = vpack.c.bf16 %v655, %v654
        %v664 = vunpack.c.l.b16 %v656
        %v665 = vunpack.c.h.b16 %v656
        %v666 = vunpack.c.l.b16 %v657
        %v667 = vunpack.c.h.b16 %v657
        %v668 = vunpack.c.l.b16 %v658
        %v669 = vunpack.c.h.b16 %v658
        %v670 = vunpack.c.l.b16 %v659
        %v671 = vunpack.c.h.b16 %v659
        %v672 = vpack.c.b16 %v664, %v664
        %v673 = vpack.c.b16 %v665, %v665
        %v674 = vpack.c.b16 %v666, %v666
        %v675 = vpack.c.b16 %v667, %v667
        %v676 = vpack.c.b16 %v668, %v668
        %v677 = vpack.c.b16 %v669, %v669
        %v678 = vpack.c.b16 %v670, %v670
        %v679 = vpack.c.b16 %v671, %v671
        %680 = vrot.lane.b32.xlu0 %v672, 28
        %v681 = vpop.permute.xlu0 %680
        %682 = vrot.lane.b32.xlu0 %v673, 28
        %v683 = vpop.permute.xlu0 %682
        %684 = vrot.lane.b32.xlu0 %v674, 28
        %v685 = vpop.permute.xlu0 %684
        %686 = vrot.lane.b32.xlu0 %v675, 28
        %v687 = vpop.permute.xlu0 %686
        %688 = vrot.lane.b32.xlu0 %v676, 28
        %v689 = vpop.permute.xlu0 %688
        %690 = vrot.lane.b32.xlu0 %v677, 28
        %v691 = vpop.permute.xlu0 %690
        %692 = vrot.lane.b32.xlu0 %v678, 28
        %v693 = vpop.permute.xlu0 %692
        %694 = vrot.lane.b32.xlu0 %v679, 28
        %v695 = vpop.permute.xlu0 %694
        %vm704 = vcmask 257248
        %705 = vst.msk [vmem:[#allocation2] sm:$0xf] %vm704, %v681
        %706 = vst.msk [vmem:[#allocation2 + $0x4] sm:$0xf] %vm704, %v683
        %707 = vst.msk [vmem:[#allocation2 + $0x8] sm:$0xf] %vm704, %v685
        %708 = vst.msk [vmem:[#allocation2 + $0xc] sm:$0xf] %vm704, %v687
        %709 = vst.msk [vmem:[#allocation2 + $0x10] sm:$0xf] %vm704, %v689
        %710 = vst.msk [vmem:[#allocation2 + $0x14] sm:$0xf] %vm704, %v691
        %711 = vst.msk [vmem:[#allocation2 + $0x18] sm:$0xf] %vm704, %v693
        %712 = vst.msk [vmem:[#allocation2 + $0x1c] sm:$0xf] %vm704, %v695
        %v713 = vld [vmem:[%s582 + $0x2] sm:$0xff]
        %v714 = vld [vmem:[%s582 + $0xa] sm:$0xff]
        %v715 = vld [vmem:[%s582 + $0x1a] sm:$0xff]
        %v716 = vld [vmem:[%s582 + $0x22] sm:$0xff]
        %v717 = vld [vmem:[%s582 + $0x32] sm:$0xff]
        %v718 = vld [vmem:[%s582 + $0x3a] sm:$0xff]
        %v719 = vld [vmem:[%s582 + $0x4a] sm:$0xff]
        %v720 = vld [vmem:[%s582 + $0x52] sm:$0xff]
        %v721 = vpack.c.bf16 %v714, %v713
        %v722 = vpack.c.bf16 %v716, %v715
        %v723 = vpack.c.bf16 %v718, %v717
        %v724 = vpack.c.bf16 %v720, %v719
        %v729 = vunpack.c.l.b16 %v721
        %v730 = vunpack.c.h.b16 %v721
        %v731 = vunpack.c.l.b16 %v722
        %v732 = vunpack.c.h.b16 %v722
        %v733 = vunpack.c.l.b16 %v723
        %v734 = vunpack.c.h.b16 %v723
        %v735 = vunpack.c.l.b16 %v724
        %v736 = vunpack.c.h.b16 %v724
        %v737 = vpack.c.b16 %v729, %v729
        %v738 = vpack.c.b16 %v730, %v730
        %v739 = vpack.c.b16 %v731, %v731
        %v740 = vpack.c.b16 %v732, %v732
        %v741 = vpack.c.b16 %v733, %v733
        %v742 = vpack.c.b16 %v734, %v734
        %v743 = vpack.c.b16 %v735, %v735
        %v744 = vpack.c.b16 %v736, %v736
        %745 = vrot.lane.b32.xlu0 %v737, 32
        %v746 = vpop.permute.xlu0 %745
        %747 = vrot.lane.b32.xlu0 %v738, 32
        %v748 = vpop.permute.xlu0 %747
        %749 = vrot.lane.b32.xlu0 %v739, 32
        %v750 = vpop.permute.xlu0 %749
        %751 = vrot.lane.b32.xlu0 %v740, 32
        %v752 = vpop.permute.xlu0 %751
        %753 = vrot.lane.b32.xlu0 %v741, 32
        %v754 = vpop.permute.xlu0 %753
        %755 = vrot.lane.b32.xlu0 %v742, 32
        %v756 = vpop.permute.xlu0 %755
        %757 = vrot.lane.b32.xlu0 %v743, 32
        %v758 = vpop.permute.xlu0 %757
        %759 = vrot.lane.b32.xlu0 %v744, 32
        %v760 = vpop.permute.xlu0 %759
        %vm769 = vcmask 290048
        %770 = vst.msk [vmem:[#allocation2] sm:$0xf] %vm769, %v746
        %771 = vst.msk [vmem:[#allocation2 + $0x4] sm:$0xf] %vm769, %v748
        %772 = vst.msk [vmem:[#allocation2 + $0x8] sm:$0xf] %vm769, %v750
        %773 = vst.msk [vmem:[#allocation2 + $0xc] sm:$0xf] %vm769, %v752
        %774 = vst.msk [vmem:[#allocation2 + $0x10] sm:$0xf] %vm769, %v754
        %775 = vst.msk [vmem:[#allocation2 + $0x14] sm:$0xf] %vm769, %v756
        %776 = vst.msk [vmem:[#allocation2 + $0x18] sm:$0xf] %vm769, %v758
        %777 = vst.msk [vmem:[#allocation2 + $0x1c] sm:$0xf] %vm769, %v760
        %v778 = vld [vmem:[#allocation2] sm:$0xf]
        %v779 = vld [vmem:[#allocation2 + $0x4] sm:$0xf]
        %v780 = vld [vmem:[#allocation2 + $0x8] sm:$0xf]
        %v781 = vld [vmem:[#allocation2 + $0xc] sm:$0xf]
        %v782 = vld [vmem:[#allocation2 + $0x10] sm:$0xf]
        %v783 = vld [vmem:[#allocation2 + $0x14] sm:$0xf]
        %v784 = vld [vmem:[#allocation2 + $0x18] sm:$0xf]
        %v785 = vld [vmem:[#allocation2 + $0x1c] sm:$0xf]
        %v786 = vld [vmem:[%s1] sm:$0xff]
        %v787 = vld [vmem:[%s1 + $0x8] sm:$0xf]
        %v788 = vld [vmem:[%s1 + $0xc] sm:$0xff]
        %v789 = vld [vmem:[%s1 + $0x14] sm:$0xf]
        %v790 = vld [vmem:[%s1 + $0x18] sm:$0xff]
        %v791 = vld [vmem:[%s1 + $0x20] sm:$0xf]
        %v792 = vld [vmem:[%s1 + $0x24] sm:$0xff]
        %v793 = vld [vmem:[%s1 + $0x2c] sm:$0xf]
        %v794 = vld [vmem:[%s1 + $0x30] sm:$0x33]
        %v795 = vld [vmem:[%s1 + $0x38] sm:$0x3]
        %v804 = vunpack.c.l.b16 %v778
        %v805 = vunpack.c.l.b16 %v779
        %v806 = vunpack.c.l.b16 %v780
        %v807 = vunpack.c.l.b16 %v781
        %v808 = vunpack.c.l.b16 %v782
        %v809 = vunpack.c.l.b16 %v783
        %v810 = vunpack.c.l.b16 %v784
        %v811 = vunpack.c.l.b16 %v785
        %v812 = vpack.c.b16 %v805, %v804
        %v813 = vpack.c.b16 %v807, %v806
        %v814 = vpack.c.b16 %v809, %v808
        %v815 = vpack.c.b16 %v811, %v810
        %v826 = vunpack.c.l.b16 %v786
        %v827 = vunpack.c.h.b16 %v786
        %v828 = vunpack.c.l.b16 %v787
        %v829 = vunpack.c.l.b16 %v788
        %v830 = vunpack.c.h.b16 %v788
        %v831 = vunpack.c.l.b16 %v789
        %v832 = vunpack.c.l.b16 %v790
        %v833 = vunpack.c.h.b16 %v790
        %v834 = vunpack.c.l.b16 %v791
        %v835 = vunpack.c.l.b16 %v792
        %v836 = vunpack.c.h.b16 %v792
        %v837 = vunpack.c.l.b16 %v793
        %v838 = vunpack.c.l.b16 %v794
        %v839 = vunpack.c.h.b16 %v794
        %v840 = vunpack.c.l.b16 %v795
        %v841 = vpack.c.b16 %v829, %v826
        %v842 = vpack.c.b16 %v830, %v827
        %v843 = vpack.c.b16 %v831, %v828
        %v844 = vpack.c.b16 %v835, %v832
        %v845 = vpack.c.b16 %v836, %v833
        %v846 = vpack.c.b16 %v837, %v834
        %v847 = vpack.c.b16 %v838, %v838
        %v848 = vpack.c.b16 %v839, %v839
        %v849 = vpack.c.b16 %v840, %v840
        %vm856 = vcmask 293888
        %v858 = vsel %vm856, %v812, 0
        %v861 = vsel %vm856, %v813, 0
        %v864 = vsel %vm856, %v814, 0
        %v867 = vsel %vm856, %v815, 0
        %vm869 = vcmask 1041408
        %v871 = vsel %vm869, %v847, 0
        %v874 = vsel %vm869, %v848, 0
        %v877 = vsel %vm869, %v849, 0
        %879 = vmatprep.subr.bf16.mxu0 0
        %880 = vmatpush1.bf16.msra.mxu0 0
        %881 = vmatprep.subr.bf16.mxu0 0
        %882 = vmatpush1.bf16.msra.mxu0 0
        %883 = vmatprep.subr.bf16.mxu0 0
        %884 = vmatpush1.bf16.msra.mxu0 0
        %885 = vmatprep.subr.bf16.mxu0 0
        %886 = vmatpush1.bf16.msra.mxu0 0
        %887 = vmatprep.subr.bf16.mxu0 0
        %888 = vmatpush1.bf16.msra.mxu0 0
        %889 = vmatprep.subr.bf16.mxu0 %v874
        %890 = vmatpush1.bf16.msra.mxu0 %v871
        %891 = vmatprep.subr.bf16.mxu0 %v845
        %892 = vmatpush1.bf16.msra.mxu0 %v844
        %893 = vmatprep.subr.bf16.mxu0 %v842
        %894 = vmatpush1.bf16.msra.mxu0 %v841
        %895 = vmatprep.subr.bf16.mxu0 0
        %896 = vmatpush2.bf16.msra.mxu0 0
        %897 = vmatprep.subr.bf16.mxu0 0
        %898 = vmatpush2.bf16.msra.mxu0 0
        %899 = vmatprep.subr.bf16.mxu0 0
        %900 = vmatpush2.bf16.msra.mxu0 0
        %901 = vmatprep.subr.bf16.mxu0 0
        %902 = vmatpush2.bf16.msra.mxu0 0
        %903 = vmatprep.subr.bf16.mxu0 0
        %904 = vmatpush2.bf16.msra.mxu0 0
        %905 = vmatprep.subr.bf16.mxu0 0
        %906 = vmatpush2.bf16.msra.mxu0 0
        %907 = vmatprep.subr.bf16.mxu0 0
        %908 = vmatpush2.bf16.msra.mxu0 0
        %909 = vmatprep.subr.bf16.mxu0 0
        %910 = vmatpush2.bf16.msra.mxu0 0
        %911 = vmatprep.mubr.bf16.mxu0 0
        %912 = vmatmul.mubr.bf16.gmra.mxu0 %v858
        %v913 = vpop.f32.mrf.mxu0
        %v914 = vadd.f32 0.0, %v913
        %v915 = vpop.f32.mrf.mxu0
        %v916 = vadd.f32 0.0, %v915
        %v917 = vpop.f32.mrf.mxu0
        %v918 = vadd.f32 0.0, %v917
        %v919 = vpop.f32.mrf.mxu0
        %v920 = vadd.f32 0.0, %v919
        %921 = vmatprep.mubr.bf16.mxu0 0
        %922 = vmatmul.mubr.bf16.gmra.mxu0 %v861
        %v923 = vpop.f32.mrf.mxu0
        %v924 = vadd.f32 0.0, %v923
        %v925 = vpop.f32.mrf.mxu0
        %v926 = vadd.f32 0.0, %v925
        %v927 = vpop.f32.mrf.mxu0
        %v928 = vadd.f32 0.0, %v927
        %v929 = vpop.f32.mrf.mxu0
        %v930 = vadd.f32 0.0, %v929
        %931 = vmatprep.mubr.bf16.mxu0 0
        %932 = vmatmul.mubr.bf16.gmra.mxu0 %v864
        %v933 = vpop.f32.mrf.mxu0
        %v934 = vadd.f32 0.0, %v933
        %v935 = vpop.f32.mrf.mxu0
        %v936 = vadd.f32 0.0, %v935
        %v937 = vpop.f32.mrf.mxu0
        %v938 = vadd.f32 0.0, %v937
        %v939 = vpop.f32.mrf.mxu0
        %v940 = vadd.f32 0.0, %v939
        %941 = vmatprep.mubr.bf16.mxu0 0
        %942 = vmatmul.mubr.bf16.gmra.mxu0 %v867
        %v943 = vpop.f32.mrf.mxu0
        %v944 = vadd.f32 0.0, %v943
        %v945 = vpop.f32.mrf.mxu0
        %v946 = vadd.f32 0.0, %v945
        %v947 = vpop.f32.mrf.mxu0
        %v948 = vadd.f32 0.0, %v947
        %v949 = vpop.f32.mrf.mxu0
        %v950 = vadd.f32 0.0, %v949
        %951 = vdwg.mxu0
        %952 = vmatprep.subr.bf16.mxu0 0
        %953 = vmatpush1.bf16.msra.mxu0 0
        %954 = vmatprep.subr.bf16.mxu0 0
        %955 = vmatpush1.bf16.msra.mxu0 0
        %956 = vmatprep.subr.bf16.mxu0 0
        %957 = vmatpush1.bf16.msra.mxu0 0
        %958 = vmatprep.subr.bf16.mxu0 0
        %959 = vmatpush1.bf16.msra.mxu0 0
        %960 = vmatprep.subr.bf16.mxu0 0
        %961 = vmatpush1.bf16.msra.mxu0 0
        %962 = vmatprep.subr.bf16.mxu0 0
        %963 = vmatpush1.bf16.msra.mxu0 %v877
        %964 = vmatprep.subr.bf16.mxu0 0
        %965 = vmatpush1.bf16.msra.mxu0 %v846
        %966 = vmatprep.subr.bf16.mxu0 0
        %967 = vmatpush1.bf16.msra.mxu0 %v843
        %968 = vmatprep.subr.bf16.mxu0 0
        %969 = vmatpush2.bf16.msra.mxu0 0
        %970 = vmatprep.subr.bf16.mxu0 0
        %971 = vmatpush2.bf16.msra.mxu0 0
        %972 = vmatprep.subr.bf16.mxu0 0
        %973 = vmatpush2.bf16.msra.mxu0 0
        %974 = vmatprep.subr.bf16.mxu0 0
        %975 = vmatpush2.bf16.msra.mxu0 0
        %976 = vmatprep.subr.bf16.mxu0 0
        %977 = vmatpush2.bf16.msra.mxu0 0
        %978 = vmatprep.subr.bf16.mxu0 0
        %979 = vmatpush2.bf16.msra.mxu0 0
        %980 = vmatprep.subr.bf16.mxu0 0
        %981 = vmatpush2.bf16.msra.mxu0 0
        %982 = vmatprep.subr.bf16.mxu0 0
        %983 = vmatpush2.bf16.msra.mxu0 0
        %984 = vmatprep.mubr.bf16.mxu0 0
        %985 = vmatmul.mubr.bf16.gmra.mxu0 %v858
        %v986 = vpop.f32.mrf.mxu0
        %v987 = vadd.f32 0.0, %v986
        %v988 = vpop.f32.mrf.mxu0
        %v989 = vpop.f32.mrf.mxu0
        %v990 = vadd.f32 0.0, %v989
        %v991 = vpop.f32.mrf.mxu0
        %992 = vmatprep.mubr.bf16.mxu0 0
        %993 = vmatmul.mubr.bf16.gmra.mxu0 %v861
        %v994 = vpop.f32.mrf.mxu0
        %v995 = vadd.f32 0.0, %v994
        %v996 = vpop.f32.mrf.mxu0
        %v997 = vpop.f32.mrf.mxu0
        %v998 = vadd.f32 0.0, %v997
        %v999 = vpop.f32.mrf.mxu0
        %1000 = vmatprep.mubr.bf16.mxu0 0
        %1001 = vmatmul.mubr.bf16.gmra.mxu0 %v864
        %v1002 = vpop.f32.mrf.mxu0
        %v1003 = vadd.f32 0.0, %v1002
        %v1004 = vpop.f32.mrf.mxu0
        %v1005 = vpop.f32.mrf.mxu0
        %v1006 = vadd.f32 0.0, %v1005
        %v1007 = vpop.f32.mrf.mxu0
        %1008 = vmatprep.mubr.bf16.mxu0 0
        %1009 = vmatmul.mubr.bf16.gmra.mxu0 %v867
        %v1010 = vpop.f32.mrf.mxu0
        %v1011 = vadd.f32 0.0, %v1010
        %v1012 = vpop.f32.mrf.mxu0
        %v1013 = vpop.f32.mrf.mxu0
        %v1014 = vadd.f32 0.0, %v1013
        %v1015 = vpop.f32.mrf.mxu0
        %1016 = vdwg.mxu0
        %p1017 = scmp.eq.s32.totalorder %s26, 0
        // Predicated region
        $region29: #{tpu_custom_call.1} parent=27 // pred_check
          %p1018 = pneg %p1017
        $region30: #{tpu_custom_call.1} parent=27 // pred_check_branch
          %1020 = sbr.rel (%p1018) target = $region32
        $region31: #{tpu_custom_call.1} parent=27 // pred_region
          %v1021 = vlaneseq
          %vm1022 = vcmp.ge.s32.totalorder %v1021, 0
          %vm1023 = vcmp.lt.s32.totalorder %v1021, 384
          %vm1024 = vmand %vm1022, %vm1023
          %1025 = vst.msk [vmem:[%s189] sm:$0x7] %vm1024, 0.0
          %1026 = vst.msk [vmem:[%s196] sm:$0x7] %vm1024, 0.0
        $region32: #{tpu_custom_call.1} parent=27 // pred_fallthru
          _
        %v1027 = vld [vmem:[%s189] sm:$0x7]
        %v1028 = vadd.f32 %v914, %v918
        %v1029 = vadd.f32 %v1028, %v924
        %v1030 = vadd.f32 %v1029, %v928
        %v1031 = vadd.f32 %v1030, %v934
        %v1032 = vadd.f32 %v1031, %v938
        %v1033 = vadd.f32 %v1032, %v944
        %v1034 = vadd.f32 %v1033, %v948
        %v1035 = vrot.slane %v1034, 4
        %v1036 = vadd.f32 %v1034, %v1035
        %v1037 = vrot.slane %v1036, 2
        %v1038 = vadd.f32 %v1036, %v1037
        %v1039 = vrot.slane %v1038, 1
        %v1040 = vadd.f32 %v1038, %v1039
        %v1041 = vadd.f32 %v916, %v920
        %v1042 = vadd.f32 %v1041, %v926
        %v1043 = vadd.f32 %v1042, %v930
        %v1044 = vadd.f32 %v1043, %v936
        %v1045 = vadd.f32 %v1044, %v940
        %v1046 = vadd.f32 %v1045, %v946
        %v1047 = vadd.f32 %v1046, %v950
        %v1048 = vrot.slane %v1047, 4
        %v1049 = vadd.f32 %v1047, %v1048
        %v1050 = vrot.slane %v1049, 2
        %v1051 = vadd.f32 %v1049, %v1050
        %v1052 = vrot.slane %v1051, 1
        %v1053 = vadd.f32 %v1051, %v1052
        %v1054 = vadd.f32 %v987, %v990
        %v1055 = vadd.f32 %v1054, %v995
        %v1056 = vadd.f32 %v1055, %v998
        %v1057 = vadd.f32 %v1056, %v1003
        %v1058 = vadd.f32 %v1057, %v1006
        %v1059 = vadd.f32 %v1058, %v1011
        %v1060 = vadd.f32 %v1059, %v1014
        %v1061 = vrot.slane %v1060, 4
        %v1062 = vadd.f32 %v1060, %v1061
        %v1063 = vrot.slane %v1062, 2
        %v1064 = vadd.f32 %v1062, %v1063
        %v1065 = vrot.slane %v1064, 1
        %v1066 = vadd.f32 %v1064, %v1065
        %v1070 = vcombine.low %v1040, %v1053
        %v1072 = vunpack.c.l.s4 1966171168
        %v1073 = vunpack.c.0.s8 %v1072
        %v1074 = vlaneseq
        %v1075 = vshrl.u32 %v1074, 7
        %v1076 = vsub.s32 %v1073, %v1075
        %v1077 = vrot.slane %v1070, %v1076
        %v1079 = vunpack.c.l.s4 1966171168
        %v1080 = vunpack.c.0.s8 %v1079
        %v1081 = vlaneseq
        %v1082 = vshrl.u32 %v1081, 7
        %v1083 = vsub.s32 %v1080, %v1082
        %v1084 = vrot.slane %v1066, %v1083
        %v1085 = vcombine.low %v1077, %v1084
        %v1087 = vunpack.c.l.s4 1966171168
        %v1088 = vunpack.c.0.s8 %v1087
        %v1089 = vlaneseq
        %v1090 = vshrl.u32 %v1089, 7
        %v1091 = vsub.s32 %v1088, %v1090
        %v1092 = vrot.slane %v1085, %v1091
        %v1094 = vadd.f32 %v1027, %v1092
        %v1095 = vlaneseq
        %vm1096 = vcmp.ge.s32.totalorder %v1095, 0
        %vm1097 = vcmp.lt.s32.totalorder %v1095, 384
        %vm1098 = vmand %vm1096, %vm1097
        %1099 = vst.msk [vmem:[%s189] sm:$0x7] %vm1098, %v1094
        %v1100 = vld [vmem:[%s196] sm:$0x7]
        %v1101 = vmul.f32 %v914, %v914
        %v1102 = vmul.f32 %v916, %v916
        %v1103 = vmul.f32 %v987, %v987
        %v1104 = vmul.f32 %v918, %v918
        %v1105 = vmul.f32 %v920, %v920
        %v1106 = vmul.f32 %v990, %v990
        %v1107 = vmul.f32 %v924, %v924
        %v1108 = vmul.f32 %v926, %v926
        %v1109 = vmul.f32 %v995, %v995
        %v1110 = vmul.f32 %v928, %v928
        %v1111 = vmul.f32 %v930, %v930
        %v1112 = vmul.f32 %v998, %v998
        %v1113 = vmul.f32 %v934, %v934
        %v1114 = vmul.f32 %v936, %v936
        %v1115 = vmul.f32 %v1003, %v1003
        %v1116 = vmul.f32 %v938, %v938
        %v1117 = vmul.f32 %v940, %v940
        %v1118 = vmul.f32 %v1006, %v1006
        %v1119 = vmul.f32 %v944, %v944
        %v1120 = vmul.f32 %v946, %v946
        %v1121 = vmul.f32 %v1011, %v1011
        %v1122 = vmul.f32 %v948, %v948
        %v1123 = vmul.f32 %v950, %v950
        %v1124 = vmul.f32 %v1014, %v1014
        %v1125 = vadd.f32 %v1101, %v1104
        %v1126 = vadd.f32 %v1125, %v1107
        %v1127 = vadd.f32 %v1126, %v1110
        %v1128 = vadd.f32 %v1127, %v1113
        %v1129 = vadd.f32 %v1128, %v1116
        %v1130 = vadd.f32 %v1129, %v1119
        %v1131 = vadd.f32 %v1130, %v1122
        %v1132 = vrot.slane %v1131, 4
        %v1133 = vadd.f32 %v1131, %v1132
        %v1134 = vrot.slane %v1133, 2
        %v1135 = vadd.f32 %v1133, %v1134
        %v1136 = vrot.slane %v1135, 1
        %v1137 = vadd.f32 %v1135, %v1136
        %v1138 = vadd.f32 %v1102, %v1105
        %v1139 = vadd.f32 %v1138, %v1108
        %v1140 = vadd.f32 %v1139, %v1111
        %v1141 = vadd.f32 %v1140, %v1114
        %v1142 = vadd.f32 %v1141, %v1117
        %v1143 = vadd.f32 %v1142, %v1120
        %v1144 = vadd.f32 %v1143, %v1123
        %v1145 = vrot.slane %v1144, 4
        %v1146 = vadd.f32 %v1144, %v1145
        %v1147 = vrot.slane %v1146, 2
        %v1148 = vadd.f32 %v1146, %v1147
        %v1149 = vrot.slane %v1148, 1
        %v1150 = vadd.f32 %v1148, %v1149
        %v1151 = vadd.f32 %v1103, %v1106
        %v1152 = vadd.f32 %v1151, %v1109
        %v1153 = vadd.f32 %v1152, %v1112
        %v1154 = vadd.f32 %v1153, %v1115
        %v1155 = vadd.f32 %v1154, %v1118
        %v1156 = vadd.f32 %v1155, %v1121
        %v1157 = vadd.f32 %v1156, %v1124
        %v1158 = vrot.slane %v1157, 4
        %v1159 = vadd.f32 %v1157, %v1158
        %v1160 = vrot.slane %v1159, 2
        %v1161 = vadd.f32 %v1159, %v1160
        %v1162 = vrot.slane %v1161, 1
        %v1163 = vadd.f32 %v1161, %v1162
        %v1167 = vcombine.low %v1137, %v1150
        %v1169 = vunpack.c.l.s4 1966171168
        %v1170 = vunpack.c.0.s8 %v1169
        %v1171 = vlaneseq
        %v1172 = vshrl.u32 %v1171, 7
        %v1173 = vsub.s32 %v1170, %v1172
        %v1174 = vrot.slane %v1167, %v1173
        %v1176 = vunpack.c.l.s4 1966171168
        %v1177 = vunpack.c.0.s8 %v1176
        %v1178 = vlaneseq
        %v1179 = vshrl.u32 %v1178, 7
        %v1180 = vsub.s32 %v1177, %v1179
        %v1181 = vrot.slane %v1163, %v1180
        %v1182 = vcombine.low %v1174, %v1181
        %v1184 = vunpack.c.l.s4 1966171168
        %v1185 = vunpack.c.0.s8 %v1184
        %v1186 = vlaneseq
        %v1187 = vshrl.u32 %v1186, 7
        %v1188 = vsub.s32 %v1185, %v1187
        %v1189 = vrot.slane %v1182, %v1188
        %v1191 = vadd.f32 %v1100, %v1189
        %1192 = vst.msk [vmem:[%s196] sm:$0x7] %vm1098, %v1191
        %s1193 = sand.u32 %s92, 1
        %s1194 = scalar_lea.sflag [#allocation4], %s1193
        %s1195 = sand.u32 %s92, 1
        %s1196 = smul.addr %s1195, 3
        %s1197 = scalar_lea.vmem [#allocation3], %s1196
        %s1198 = sand.u32 %s118, 1
        %s1199 = scalar_lea.sflag [#allocation6], %s1198
        %s1200 = sand.u32 %s118, 1
        %s1201 = smul.addr %s1200, 3
        %s1202 = scalar_lea.vmem [#allocation5], %s1201
        // Predicated region
        $region33: #{tpu_custom_call.1} parent=27 // pred_check
          %p1203 = pneg %p102
        $region34: #{tpu_custom_call.1} parent=27 // pred_check_branch
          %1205 = sbr.rel (%p1203) target = $region36
        $region35: #{tpu_custom_call.1} parent=27 // pred_region
          %s1207 = ssub.s32 48, 48
          %1208 = vsyncadd %s1194, %s1207
          %s1209 = smul.addr %s25, 3
          %s1210 = smul.addr %s1209, 16
          %s1211 = scalar_lea.hbm %s2, %s1210
          %s1213 = sshll.u32 %s1197, 4
          %s1214 = int_to_ptr.vmem [resolvable:$true] %s1213
          %1216 = dma.vmem_to_hbm [thread:$0]  %s1214, 48, %s1211, %s1194
        $region36: #{tpu_custom_call.1} parent=27 // pred_fallthru
          _
        // Predicated region
        $region37: #{tpu_custom_call.1} parent=27 // pred_check
          %p1217 = pneg %p128
        $region38: #{tpu_custom_call.1} parent=27 // pred_check_branch
          %1219 = sbr.rel (%p1217) target = $region40
        $region39: #{tpu_custom_call.1} parent=27 // pred_region
          %s1221 = ssub.s32 48, 48
          %1222 = vsyncadd %s1199, %s1221
          %s1223 = smul.addr %s25, 3
          %s1224 = smul.addr %s1223, 16
          %s1225 = scalar_lea.hbm %s3, %s1224
          %s1227 = sshll.u32 %s1202, 4
          %s1228 = int_to_ptr.vmem [resolvable:$true] %s1227
          %1230 = dma.vmem_to_hbm [thread:$0]  %s1228, 48, %s1225, %s1199
        $region40: #{tpu_custom_call.1} parent=27 // pred_fallthru
          _
      $region28: #{tpu_custom_call.1} parent=5 // pred_fallthru
        _
      %p1231 = scmp.le.s32.totalorder 2, %s16
      // Predicated region
      $region41: #{tpu_custom_call.1} parent=5 // pred_check
        %p1232 = pneg %p1231
      $region42: #{tpu_custom_call.1} parent=5 // pred_check_branch
        %1234 = sbr.rel (%p1232) target = $region44
      $region43: #{tpu_custom_call.1} parent=5 // pred_region
        %s1235 = ssub.s32 %s16, 2
        // Predicated region
        $region45: #{tpu_custom_call.1} parent=43 // pred_check
          %p1236 = pneg %p108
        $region46: #{tpu_custom_call.1} parent=43 // pred_check_branch
          %1238 = sbr.rel (%p1236) target = $region48
        $region47: #{tpu_custom_call.1} parent=43 // pred_region
          %s1239 = sand.u32 %s93, 1
          %s1240 = scalar_lea.sflag [#allocation4], %s1239
          %s1241 = sand.u32 %s93, 1
          %s1242 = smul.addr %s1241, 3
          %s1243 = scalar_lea.vmem [#allocation3], %s1242
          %1244 = dma.done %s1240, 48
        $region48: #{tpu_custom_call.1} parent=43 // pred_fallthru
          _
        // Predicated region
        $region49: #{tpu_custom_call.1} parent=43 // pred_check
          %p1245 = pneg %p134
        $region50: #{tpu_custom_call.1} parent=43 // pred_check_branch
          %1247 = sbr.rel (%p1245) target = $region52
        $region51: #{tpu_custom_call.1} parent=43 // pred_region
          %s1248 = sand.u32 %s119, 1
          %s1249 = scalar_lea.sflag [#allocation6], %s1248
          %s1250 = sand.u32 %s119, 1
          %s1251 = smul.addr %s1250, 3
          %s1252 = scalar_lea.vmem [#allocation5], %s1251
          %1253 = dma.done %s1249, 48
        $region52: #{tpu_custom_call.1} parent=43 // pred_fallthru
          _
      $region44: #{tpu_custom_call.1} parent=5 // pred_fallthru
        _
    $region6: #{tpu_custom_call.1} parent=1 // loop_footer
      %s20 = sadd.s32 1, %s16
    $region7: #{tpu_custom_call.1} parent=1 // loop_footer_branch
      %15 = sbr.rel target = $region3
    $region8: #{tpu_custom_call.1} parent=1 // loop_exit
      _
    %1254 = vsyncpa [#allocation4], 1
    %s1255 = scalar_lea.sflag [#allocation4], 1
    %1256 = vsyncpa %s1255, 1
    %1257 = vsyncpa [#allocation6], 1
    %s1258 = scalar_lea.sflag [#allocation6], 1
    %1259 = vsyncpa %s1258, 1

</llo_original>
